<compile_context>
chip_gen: v6e
topology: v6e:2x2x1
jax: 0.10.0
libtpu: 0.0.40
codegen_flags: <defaults>
</compile_context>

<pallas_src>
import functools
import numpy as np

import jax
import jax.numpy as jnp
from jax import lax
from jax.experimental import pallas as pl
from jax.experimental.pallas import tpu as pltpu

# ----------------------------------------------------------------------------
# Synthetic, deterministic stand-ins for cfg.DANET.* and smpl_structure()
# ----------------------------------------------------------------------------
NUM_PATCHES = 24            # -> 25 channels each for U / V / Index
NUM_ANN = 15                # ann-index channels
NUM_SMPL_KPS = 24           # keypoint heatmap channels
PART_UVI_SCALE = 1.0        # cfg.DANET.PART_UVI_SCALE
PART_UVI_LR_OFFSET = 0.2    # cfg.DANET.PART_UVI_LR_OFFSET

# SMPL kinematic tree (deterministic stand-in for smpl_structure('smpl_parents')
# and smpl_structure('smpl_children')[1]).
SMPL_PARENTS = np.array([0, 0, 0, 0, 1, 2, 3, 4, 5, 6, 7, 8, 9, 9, 9,
                         12, 13, 14, 16, 17, 18, 19, 20, 21], dtype=np.int32)
SMPL_CHILDREN = np.array([3, 1, 2, 6, 7, 8, 9, 10, 11, 12, 10, 11, 15,
                          16, 17, 15, 18, 19, 20, 21, 22, 23, 22, 23], dtype=np.int32)

# Channel-first head layout: [HM(24) | U(25) | V(25) | I(25) | Ann(15)] = 114 -> pad 128.
HM_OFF = 0
U_OFF = HM_OFF + NUM_SMPL_KPS
V_OFF = U_OFF + (NUM_PATCHES + 1)
I_OFF = V_OFF + (NUM_PATCHES + 1)
ANN_OFF = I_OFF + (NUM_PATCHES + 1)
HEAD_COUT = ANN_OFF + NUM_ANN          # 114
HEAD_COUT_PAD = 128                    # sublane-dense padded output width


def _round_up(x, m):
    return ((x + m - 1) // m) * m


def _make_tree_gather():
    """(48, 24) = [child_onehot ; parent_onehot]; (M @ c)[i] = c[child[i]] (i<24) / c[parent[i-24]]."""
    eye = np.eye(NUM_SMPL_KPS, dtype=np.float32)
    return np.concatenate([eye[SMPL_CHILDREN], eye[SMPL_PARENTS]], axis=0)


_TREE_GATHER = _make_tree_gather()


def _make_coords(h, w, hw_pad):
    """(8, hw_pad) float32 table: row0 = x, row1 = y, row2 = valid (1 for real pixels)."""
    hw = h * w
    tab = np.zeros((8, hw_pad), np.float32)
    tab[0, :hw] = (np.arange(hw) % w).astype(np.float32)
    tab[1, :hw] = (np.arange(hw) // w).astype(np.float32)
    tab[2, :hw] = 1.0
    return tab


# ----------------------------------------------------------------------------
# Kernel 1: IUV head — channel matmul (the 1x1-conv hot path), channel-first
# ----------------------------------------------------------------------------
def _head_kernel(x_ref, wt_ref, b_ref, o_ref, hm_ref):
    # x:  (Cin, TILE)   wT: (128, Cin)   b: (128, 1)
    # o:  (128, TILE) bf16 (lane-dense, unmasked stores)
    # hm: (24, TILE)  f32  heatmap slab in the layout kernel 2 consumes directly
    y = jnp.dot(wt_ref[...], x_ref[...],
                preferred_element_type=jnp.float32) + b_ref[...]
    o_ref[...] = y.astype(o_ref.dtype)
    hm_ref[...] = y[HM_OFF:HM_OFF + NUM_SMPL_KPS, :]


def iuv_head(x3, wt_pad, b_pad, *, tile):
    """x3: (B, Cin, hw_pad) f32; wt_pad: (128, Cin); b_pad: (128, 1).

    Returns (main, hm): (B, 128, hw_pad) bf16 and (B, 24, hw_pad) f32.
    """
    b, cin, hwp = x3.shape
    cout = wt_pad.shape[0]
    assert hwp % tile == 0
    return pl.pallas_call(
        _head_kernel,
        out_shape=(jax.ShapeDtypeStruct((b, cout, hwp), jnp.bfloat16),
                   jax.ShapeDtypeStruct((b, NUM_SMPL_KPS, hwp), jnp.float32)),
        grid_spec=pltpu.PrefetchScalarGridSpec(
            num_scalar_prefetch=0,
            grid=(b, hwp // tile),
            in_specs=[pl.BlockSpec((None, cin, tile), lambda bb, i: (bb, 0, i)),
                      pl.BlockSpec((cout, cin), lambda bb, i: (0, 0)),
                      pl.BlockSpec((cout, 1), lambda bb, i: (0, 0))],
            out_specs=[pl.BlockSpec((None, cout, tile), lambda bb, i: (bb, 0, i)),
                       pl.BlockSpec((None, NUM_SMPL_KPS, tile), lambda bb, i: (bb, 0, i))]),
        # Both axes independent -> megacore / v7x two-TC sharding.
        compiler_params=pltpu.CompilerParams(
            dimension_semantics=("parallel", "parallel")),
    )(x3, wt_pad, b_pad)


# ----------------------------------------------------------------------------
# Kernel 2 (fused): softmax-integral STN centers + affine_para scales
#   layout: K (=24 joints) on sublanes, HW on lanes (lane-dense exp / reductions)
# ----------------------------------------------------------------------------
def _stn_affine_kernel(hm_ref, coord_ref, tree_ref, ro_ref, out_ref, *, height, width):
    # hm:    (24, HWpad)  heatmaps for one batch element
    # coord: (8,  HWpad)  rows [x, y, valid, 0...]
    # tree:  (48, 24)     [child_onehot ; parent_onehot]
    # ro:    (24, 2)      cols [learned_ratio, learned_offset]
    # out:   (24, 3)      cols [cx, cy, scale]
    k = NUM_SMPL_KPS
    coord = coord_ref[...]
    xs = coord[0:1, :]                                         # (1, HW)
    ys = coord[1:2, :]
    valid = coord[2:3, :]

    logits = 10.0 * hm_ref[...].astype(jnp.float32)            # (24, HW)
    logits = jnp.where(valid > 0.0, logits, -1e30)             # mask padded columns
    m = jnp.max(logits, axis=-1, keepdims=True)                # (24, 1)
    e = jnp.exp(logits - m)                                    # (24, HW)   (EUP)
    sum_e = jnp.sum(e, axis=-1, keepdims=True)                 # (24, 1)    (lane reduce)
    sum_ex = jnp.sum(e * xs, axis=-1, keepdims=True)
    sum_ey = jnp.sum(e * ys, axis=-1, keepdims=True)
    inv = pl.reciprocal(sum_e, approx=True)                    # narrow EUP reciprocal
    # softmax_integral -> stn_centers /= 0.5*size ; -= 1
    cx = sum_ex * inv * (2.0 / width) - 1.0                    # (24, 1)
    cy = sum_ey * inv * (2.0 / height) - 1.0

    # affine_para(): bounding-box scale for the root joint
    box_x = jnp.max(cx, axis=0, keepdims=True) - jnp.min(cx, axis=0, keepdims=True)
    box_y = jnp.max(cy, axis=0, keepdims=True) - jnp.min(cy, axis=0, keepdims=True)
    scale_box = jnp.maximum(box_x, box_y) * 0.5                # (1, 1)

    # child/parent gathers as a static one-hot matmul on the otherwise-idle MXU
    col2 = lax.broadcasted_iota(jnp.int32, (k, 2), 1)
    c2 = jnp.where(col2 == 0, cx, cy)                          # (24, 2) = [cx | cy]
    g = jnp.dot(tree_ref[...], c2, preferred_element_type=jnp.float32)   # (48, 2)
    dcx = g[0:k, 0:1] - cx
    dcy = g[0:k, 1:2] - cy
    dpx = g[k:2 * k, 0:1] - cx
    dpy = g[k:2 * k, 1:2] - cy
    scale_c = jnp.sqrt(dcx * dcx + dcy * dcy) * 0.5
    scale_p = jnp.sqrt(dpx * dpx + dpy * dpy) * 0.5
    scale = 2.0 * jnp.maximum(scale_c, scale_p)                # (24, 1)
    part_id = lax.broadcasted_iota(jnp.int32, (k, 1), 0)
    scale = jnp.where(part_id == 0, scale_box, scale)          # root joint uses box scale
    ro = ro_ref[...]
    scale = scale * jnp.maximum(ro[:, 0:1], 0.0) + jnp.maximum(ro[:, 1:2], 0.0)

    # pack [cx | cy | scale] into (24, 3) without a lane-concatenate
    col3 = lax.broadcasted_iota(jnp.int32, (k, 3), 1)
    out_ref[...] = jnp.where(col3 == 0, cx, jnp.where(col3 == 1, cy, scale))


def stn_affine(hm_slab, coords, treeT, ro, *, height, width):
    """hm_slab: (B, 24, hw_pad) f32; returns (B, 24, 3) with cols [cx, cy, scale]."""
    b, k, hwp = hm_slab.shape
    kern = functools.partial(_stn_affine_kernel, height=height, width=width)
    return pl.pallas_call(
        kern,
        out_shape=jax.ShapeDtypeStruct((b, k, 3), jnp.float32),
        grid_spec=pltpu.PrefetchScalarGridSpec(
            num_scalar_prefetch=0,
            grid=(b,),
            in_specs=[pl.BlockSpec((None, k, hwp), lambda i: (i, 0, 0)),
                      pl.BlockSpec((8, hwp), lambda i: (0, 0)),
                      pl.BlockSpec((2 * k, k), lambda i: (0, 0)),
                      pl.BlockSpec((k, 2), lambda i: (0, 0))],
            out_specs=pl.BlockSpec((None, k, 3), lambda i: (i, 0, 0))),
        compiler_params=pltpu.CompilerParams(dimension_semantics=("parallel",)),
    )(hm_slab, coords, treeT, ro)


# ----------------------------------------------------------------------------
# Module forward
# ----------------------------------------------------------------------------
def iuv_estimator_forward(data, params, *, head_tile=1024):
    """data: (B, Cin, H, W) float32 (NCHW, same as the PyTorch module)."""
    B, Cin, H, W = data.shape
    hw = H * W

    # lane-dense, pipeline-friendly HW padding (no transpose: NCHW reshape is free)
    hw128 = _round_up(hw, 128)
    tile = max(128, (min(head_tile, hw128) // 128) * 128)
    hw_pad = _round_up(hw, tile)
    x3 = data.reshape(B, Cin, hw)
    if hw_pad != hw:
        x3 = jnp.pad(x3, ((0, 0), (0, 0), (0, hw_pad - hw)))

    # Padded, channel-first head weights/bias (zeros in padded rows -> no leakage).
    # head_w is stored (Cout, Cin) = PyTorch 1x1-conv orientation; cast x/w to bf16 too
    # if the real backbone Cin (256-720) makes input traffic matter.
    wt_pad = jnp.pad(params['head_w'], ((0, HEAD_COUT_PAD - HEAD_COUT), (0, 0)))
    b_pad = jnp.pad(params['head_b'], (0, HEAD_COUT_PAD - HEAD_COUT)).reshape(HEAD_COUT_PAD, 1)

    y, hm_slab = iuv_head(x3, wt_pad, b_pad, tile=tile)
    # y:       (B, 128, hw_pad) bf16   (channel-first; channel slices = sublane slices)
    # hm_slab: (B, 24,  hw_pad) f32    (exact layout kernel 2 consumes, no extra pass)

    def _take(off, n):   # NCHW prediction maps (bf16)
        return y[:, off:off + n, :hw].reshape(B, n, H, W)

    u_pred = _take(U_OFF, NUM_PATCHES + 1)
    v_pred = _take(V_OFF, NUM_PATCHES + 1)
    index_pred = _take(I_OFF, NUM_PATCHES + 1)
    ann_pred = _take(ANN_OFF, NUM_ANN)
    skps_hm_pred = hm_slab[:, :, :hw].reshape(B, NUM_SMPL_KPS, H, W)   # f32

    return_dict = {'losses': {}, 'metrics': {}, 'visualization': {}}
    # NOTE: prediction maps are bf16 (f32-accumulated); cast at the consumer if needed.
    return_dict['uvia_pred'] = [u_pred, v_pred, index_pred, ann_pred]
    return_dict['skps_hm_pred'] = skps_hm_pred

    # --- DECOMPOSED branch: fused STN centers + affine parameters -----------
    coords = jnp.asarray(_make_coords(H, W, hw_pad))             # (8, hw_pad) constant
    treeT = jnp.asarray(_TREE_GATHER)                            # (48, 24) constant
    ro = jnp.stack([params['learned_ratio'], params['learned_offset']], axis=-1)  # (24, 2)
    sc = stn_affine(hm_slab, coords, treeT, ro, height=H, width=W)   # (B, 24, 3)

    cx, cy, scales_bk = sc[..., 0], sc[..., 1], sc[..., 2]
    return_dict['stn_kps_pred'] = sc[..., 0:2]                    # (B, 24, 2)

    # theta assembly (pure placement, no compute):
    #   theta_i[:,0,0]=scale, theta_i[:,1,1]=scale, theta_i[:,:, -1]=center
    zeros = jnp.zeros_like(scales_bk)
    row0 = jnp.stack([scales_bk, zeros, cx], axis=-1)             # (B, 24, 3)
    row1 = jnp.stack([zeros, scales_bk, cy], axis=-1)             # (B, 24, 3)
    thetas = jnp.stack([row0, row1], axis=2)                      # (B, 24, 2, 3)
    return_dict['thetas'] = jnp.transpose(thetas, (1, 0, 2, 3))   # (24, B, 2, 3)
    return_dict['scales'] = jnp.transpose(scales_bk, (1, 0))      # (24, B)
    # TODO(synk): F.affine_grid + F.grid_sample part warping and the
    #             predict_partial_iuv head (external submodule) not implemented.
    # TODO(synk): body_uv_losses / dp_uvia_losses skipped (no GT inputs given).
    return return_dict


# ----------------------------------------------------------------------------
# Pure-JAX references (for correctness checks only)
# ----------------------------------------------------------------------------
def _reference_head(data, params):
    B, Cin, H, W = data.shape
    x = data.reshape(B, Cin, H * W)
    y = jnp.einsum('oc,bcp->bop', params['head_w'], x) + params['head_b'][None, :, None]
    return y.reshape(B, HEAD_COUT, H, W)


def _reference_stn_affine(hm, learned_ratio, learned_offset):
    B, K, H, W = hm.shape
    logits = 10.0 * hm.reshape(B, K, H * W)
    p = jax.nn.softmax(logits, axis=-1)
    xs = jnp.asarray((np.arange(H * W) % W).astype(np.float32))
    ys = jnp.asarray((np.arange(H * W) // W).astype(np.float32))
    ex = jnp.einsum('bkp,p->bk', p, xs)
    ey = jnp.einsum('bkp,p->bk', p, ys)
    cx = ex / (0.5 * W) - 1.0
    cy = ey / (0.5 * H) - 1.0
    centers = jnp.stack([cx, cy], axis=-1)                        # (B, 24, 2)
    box = jnp.max(centers, axis=1) - jnp.min(centers, axis=1)
    scale_box = jnp.max(box, axis=1) / 2.0
    ch = centers[:, SMPL_CHILDREN]
    pa = centers[:, SMPL_PARENTS]
    sc = jnp.linalg.norm(ch - centers, axis=-1) / 2.0
    sp = jnp.linalg.norm(pa - centers, axis=-1) / 2.0
    scale = 2.0 * jnp.maximum(sc, sp)
    scale = scale.at[:, 0].set(scale_box)
    scale = scale * jnp.maximum(learned_ratio, 0.0) + jnp.maximum(learned_offset, 0.0)
    return centers, scale


# ----------------------------------------------------------------------------
def make_params(key, cin):
    k_w, k_b = jax.random.split(key)
    head_w = jax.random.normal(k_w, (HEAD_COUT, cin), jnp.float32) * 0.1   # (Cout, Cin)
    head_b = jax.random.normal(k_b, (HEAD_COUT,), jnp.float32) * 0.01
    learned_ratio = PART_UVI_SCALE * jnp.ones((NUM_SMPL_KPS,), jnp.float32)
    learned_offset = PART_UVI_LR_OFFSET * jnp.ones((NUM_SMPL_KPS,), jnp.float32)
    return dict(head_w=head_w, head_b=head_b,
                learned_ratio=learned_ratio, learned_offset=learned_offset)


if __name__ == "__main__":
    key = jax.random.PRNGKey(0)
    k_data, k_params = jax.random.split(key)
    B, Cin, H, W = 2, 4, 16, 16
    data = jax.random.normal(k_data, (B, Cin, H, W), jnp.float32)
    params = make_params(k_params, Cin)

    out = jax.jit(iuv_estimator_forward)(data, params)
    jax.block_until_ready(jax.tree_util.tree_leaves(out))

    # shape checks (NCHW layout, matching the PyTorch module)
    assert out['uvia_pred'][0].shape == (B, NUM_PATCHES + 1, H, W)
    assert out['uvia_pred'][3].shape == (B, NUM_ANN, H, W)
    assert out['skps_hm_pred'].shape == (B, NUM_SMPL_KPS, H, W)
    assert out['stn_kps_pred'].shape == (B, NUM_SMPL_KPS, 2)
    assert out['thetas'].shape == (NUM_SMPL_KPS, B, 2, 3)
    assert out['scales'].shape == (NUM_SMPL_KPS, B)

    def f32(a):
        return np.asarray(jnp.asarray(a, jnp.float32))

    # numeric checks (bf16 head output -> 2e-2 tolerance; approx reciprocal ~1e-3 rel)
    ref_y = _reference_head(data, params)
    np.testing.assert_allclose(f32(out['skps_hm_pred']),
                               f32(ref_y[:, HM_OFF:HM_OFF + NUM_SMPL_KPS]),
                               rtol=2e-2, atol=2e-2)
    np.testing.assert_allclose(f32(out['uvia_pred'][0]),
                               f32(ref_y[:, U_OFF:U_OFF + NUM_PATCHES + 1]),
                               rtol=2e-2, atol=2e-2)
    # STN/affine reference computed from the kernel's own (f32) heatmap output,
    # isolating kernel 2.
    ref_centers, ref_scales = _reference_stn_affine(out['skps_hm_pred'],
                                                    params['learned_ratio'],
                                                    params['learned_offset'])
    np.testing.assert_allclose(f32(out['stn_kps_pred']), f32(ref_centers),
                               rtol=0, atol=2e-2)
    np.testing.assert_allclose(f32(out['scales']), f32(ref_scales.T),
                               rtol=0, atol=2e-2)

    print("KERNEL_OK")
</pallas_src>

<mosaic_0001>
module attributes {stable_mosaic.version = 11 : i64} {
  func.func @_head_kernel(%arg0: i32, %arg1: i32, %arg2: memref<1x4x256xf32, #tpu.memory_space<vmem>>, %arg3: memref<128x4xf32, #tpu.memory_space<vmem>>, %arg4: memref<128x1xf32, #tpu.memory_space<vmem>>, %arg5: memref<1x128x256xbf16, #tpu.memory_space<vmem>>, %arg6: memref<1x24x256xf32, #tpu.memory_space<vmem>>) attributes {dimension_semantics = [#tpu.dimension_semantics<parallel>, #tpu.dimension_semantics<parallel>], iteration_bounds = array<i64: 2, 1>, scalar_prefetch = 0 : i64, scratch_operands = 0 : i64, tpu.core_type = #tpu.core_type<tc>, window_params = [{transform_indices = @transform_0, window_bounds = array<i64: 1, 4, 256>}, {pipeline_mode = #tpu.pipeline_mode<synchronous>, transform_indices = @transform_1, window_bounds = array<i64: 128, 4>}, {pipeline_mode = #tpu.pipeline_mode<synchronous>, transform_indices = @transform_2, window_bounds = array<i64: 128, 1>}, {transform_indices = @transform_3, window_bounds = array<i64: 1, 128, 256>}, {transform_indices = @transform_4, window_bounds = array<i64: 1, 24, 256>}]} {
    %c0 = arith.constant 0 : index
    %c0_0 = arith.constant 0 : index
    %0 = vector.load %arg3[%c0, %c0_0] : memref<128x4xf32, #tpu.memory_space<vmem>>, vector<128x4xf32>
    %c0_1 = arith.constant 0 : index
    %c0_2 = arith.constant 0 : index
    %c0_3 = arith.constant 0 : index
    %1 = vector.load %arg2[%c0_1, %c0_2, %c0_3] : memref<1x4x256xf32, #tpu.memory_space<vmem>>, vector<1x4x256xf32>
    %2 = vector.shape_cast %1 : vector<1x4x256xf32> to vector<4x256xf32>
    %cst = arith.constant dense<0.000000e+00> : vector<128x256xf32>
    %3 = tpu.matmul %0, %2, %cst {dimension_numbers = #tpu.dot_dimension_numbers<[1], [0], [0], [1], [0, 0, 1, 1], [], []>} : vector<128x4xf32>, vector<4x256xf32>, vector<128x256xf32> -> vector<128x256xf32>
    %c0_4 = arith.constant 0 : index
    %c0_5 = arith.constant 0 : index
    %4 = vector.load %arg4[%c0_4, %c0_5] : memref<128x1xf32, #tpu.memory_space<vmem>>, vector<128x1xf32>
    %5 = vector.broadcast %4 : vector<128x1xf32> to vector<128x256xf32>
    %6 = arith.addf %3, %5 : vector<128x256xf32>
    %7 = arith.truncf %6 : vector<128x256xf32> to vector<128x256xbf16>
    %c0_6 = arith.constant 0 : index
    %c0_7 = arith.constant 0 : index
    %c0_8 = arith.constant 0 : index
    %8 = vector.load %arg5[%c0_6, %c0_7, %c0_8] : memref<1x128x256xbf16, #tpu.memory_space<vmem>>, vector<1x128x256xbf16>
    %9 = vector.shape_cast %8 : vector<1x128x256xbf16> to vector<128x256xbf16>
    %10 = vector.shape_cast %7 : vector<128x256xbf16> to vector<1x128x256xbf16>
    tpu.vector_store %arg5[%c0_6, %c0_7, %c0_8], %10 {strides = array<i32>} : memref<1x128x256xbf16, #tpu.memory_space<vmem>>, vector<1x128x256xbf16>,
    %11 = vector.extract_strided_slice %6 {offsets = [0, 0], sizes = [24, 256], strides = [1, 1]} : vector<128x256xf32> to vector<24x256xf32>
    %c0_9 = arith.constant 0 : index
    %c0_10 = arith.constant 0 : index
    %c0_11 = arith.constant 0 : index
    %12 = vector.load %arg6[%c0_9, %c0_10, %c0_11] : memref<1x24x256xf32, #tpu.memory_space<vmem>>, vector<1x24x256xf32>
    %13 = vector.shape_cast %12 : vector<1x24x256xf32> to vector<24x256xf32>
    %14 = vector.shape_cast %11 : vector<24x256xf32> to vector<1x24x256xf32>
    tpu.vector_store %arg6[%c0_9, %c0_10, %c0_11], %14 {strides = array<i32>} : memref<1x24x256xf32, #tpu.memory_space<vmem>>, vector<1x24x256xf32>,
    return
  }
  func.func @transform_0(%arg0: i32, %arg1: i32) -> (i32, i32, i32) {
    %c0_i32 = arith.constant 0 : i32
    %c0_i32_0 = arith.constant 0 : i32
    return %arg0, %c0_i32, %arg1 : i32, i32, i32
  }
  func.func @transform_1(%arg0: i32, %arg1: i32) -> (i32, i32) {
    %c0_i32 = arith.constant 0 : i32
    %c0_i32_0 = arith.constant 0 : i32
    %c0_i32_1 = arith.constant 0 : i32
    return %c0_i32, %c0_i32_0 : i32, i32
  }
  func.func @transform_2(%arg0: i32, %arg1: i32) -> (i32, i32) {
    %c0_i32 = arith.constant 0 : i32
    %c0_i32_0 = arith.constant 0 : i32
    %c0_i32_1 = arith.constant 0 : i32
    return %c0_i32, %c0_i32_0 : i32, i32
  }
  func.func @transform_3(%arg0: i32, %arg1: i32) -> (i32, i32, i32) {
    %c0_i32 = arith.constant 0 : i32
    %c0_i32_0 = arith.constant 0 : i32
    return %arg0, %c0_i32, %arg1 : i32, i32, i32
  }
  func.func @transform_4(%arg0: i32, %arg1: i32) -> (i32, i32, i32) {
    %c0_i32 = arith.constant 0 : i32
    %c0_i32_0 = arith.constant 0 : i32
    return %arg0, %c0_i32, %arg1 : i32, i32, i32
  }
}

module attributes {stable_mosaic.version = 11 : i64} {
  func.func @_stn_affine_kernel(%arg0: i32, %arg1: memref<1x24x256xf32, #tpu.memory_space<vmem>>, %arg2: memref<8x256xf32, #tpu.memory_space<vmem>>, %arg3: memref<48x24xf32, #tpu.memory_space<vmem>>, %arg4: memref<24x2xf32, #tpu.memory_space<vmem>>, %arg5: memref<1x24x3xf32, #tpu.memory_space<vmem>>) attributes {dimension_semantics = [#tpu.dimension_semantics<parallel>], iteration_bounds = array<i64: 2>, scalar_prefetch = 0 : i64, scratch_operands = 0 : i64, tpu.core_type = #tpu.core_type<tc>, window_params = [{transform_indices = @transform_0, window_bounds = array<i64: 1, 24, 256>}, {pipeline_mode = #tpu.pipeline_mode<synchronous>, transform_indices = @transform_1, window_bounds = array<i64: 8, 256>}, {pipeline_mode = #tpu.pipeline_mode<synchronous>, transform_indices = @transform_2, window_bounds = array<i64: 48, 24>}, {pipeline_mode = #tpu.pipeline_mode<synchronous>, transform_indices = @transform_3, window_bounds = array<i64: 24, 2>}, {transform_indices = @transform_4, window_bounds = array<i64: 1, 24, 3>}]} {
    %c0 = arith.constant 0 : index
    %c0_0 = arith.constant 0 : index
    %0 = vector.load %arg2[%c0, %c0_0] : memref<8x256xf32, #tpu.memory_space<vmem>>, vector<8x256xf32>
    %1 = vector.extract_strided_slice %0 {offsets = [0, 0], sizes = [1, 256], strides = [1, 1]} : vector<8x256xf32> to vector<1x256xf32>
    %2 = vector.extract_strided_slice %0 {offsets = [1, 0], sizes = [1, 256], strides = [1, 1]} : vector<8x256xf32> to vector<1x256xf32>
    %3 = vector.extract_strided_slice %0 {offsets = [2, 0], sizes = [1, 256], strides = [1, 1]} : vector<8x256xf32> to vector<1x256xf32>
    %c0_1 = arith.constant 0 : index
    %c0_2 = arith.constant 0 : index
    %c0_3 = arith.constant 0 : index
    %4 = vector.load %arg1[%c0_1, %c0_2, %c0_3] : memref<1x24x256xf32, #tpu.memory_space<vmem>>, vector<1x24x256xf32>
    %5 = vector.shape_cast %4 : vector<1x24x256xf32> to vector<24x256xf32>
    %cst = arith.constant 1.000000e+01 : f32
    %6 = vector.broadcast %cst : f32 to vector<24x256xf32>
    %7 = arith.mulf %6, %5 : vector<24x256xf32>
    %cst_4 = arith.constant 0.000000e+00 : f32
    %8 = vector.broadcast %cst_4 : f32 to vector<1x256xf32>
    %9 = arith.cmpf ogt, %3, %8 : vector<1x256xf32>
    %cst_5 = arith.constant -1.000000e+30 : f32
    %10 = vector.shape_cast %9 : vector<1x256xi1> to vector<1x256xi1>
    %11 = vector.broadcast %10 : vector<1x256xi1> to vector<24x256xi1>
    %12 = vector.broadcast %cst_5 : f32 to vector<24x256xf32>
    %13 = arith.select %11, %7, %12 : vector<24x256xi1>, vector<24x256xf32>
    %cst_6 = arith.constant dense<0xFF800000> : vector<24xf32>
    %14 = vector.multi_reduction <maximumf>, %13, %cst_6 [1] : vector<24x256xf32> to vector<24xf32>
    %15 = vector.shape_cast %14 : vector<24xf32> to vector<24x1xf32>
    %16 = vector.broadcast %15 : vector<24x1xf32> to vector<24x256xf32>
    %17 = arith.subf %13, %16 : vector<24x256xf32>
    %18 = math.exp %17 : vector<24x256xf32>
    %cst_7 = arith.constant dense<0.000000e+00> : vector<24xf32>
    %19 = vector.multi_reduction <add>, %18, %cst_7 [1] : vector<24x256xf32> to vector<24xf32>
    %20 = vector.shape_cast %19 : vector<24xf32> to vector<24x1xf32>
    %21 = vector.broadcast %1 : vector<1x256xf32> to vector<24x256xf32>
    %22 = arith.mulf %18, %21 : vector<24x256xf32>
    %cst_8 = arith.constant dense<0.000000e+00> : vector<24xf32>
    %23 = vector.multi_reduction <add>, %22, %cst_8 [1] : vector<24x256xf32> to vector<24xf32>
    %24 = vector.shape_cast %23 : vector<24xf32> to vector<24x1xf32>
    %25 = vector.broadcast %2 : vector<1x256xf32> to vector<24x256xf32>
    %26 = arith.mulf %18, %25 : vector<24x256xf32>
    %cst_9 = arith.constant dense<0.000000e+00> : vector<24xf32>
    %27 = vector.multi_reduction <add>, %26, %cst_9 [1] : vector<24x256xf32> to vector<24xf32>
    %28 = vector.shape_cast %27 : vector<24xf32> to vector<24x1xf32>
    %29 = tpu.reciprocal %20 {approx = true} : vector<24x1xf32> -> vector<24x1xf32>
    %30 = arith.mulf %24, %29 : vector<24x1xf32>
    %cst_10 = arith.constant 1.250000e-01 : f32
    %31 = vector.broadcast %cst_10 : f32 to vector<24x1xf32>
    %32 = arith.mulf %30, %31 : vector<24x1xf32>
    %cst_11 = arith.constant 1.000000e+00 : f32
    %33 = vector.broadcast %cst_11 : f32 to vector<24x1xf32>
    %34 = arith.subf %32, %33 : vector<24x1xf32>
    %35 = arith.mulf %28, %29 : vector<24x1xf32>
    %cst_12 = arith.constant 1.250000e-01 : f32
    %36 = vector.broadcast %cst_12 : f32 to vector<24x1xf32>
    %37 = arith.mulf %35, %36 : vector<24x1xf32>
    %cst_13 = arith.constant 1.000000e+00 : f32
    %38 = vector.broadcast %cst_13 : f32 to vector<24x1xf32>
    %39 = arith.subf %37, %38 : vector<24x1xf32>
    %cst_14 = arith.constant dense<0xFF800000> : vector<1xf32>
    %40 = vector.multi_reduction <maximumf>, %34, %cst_14 [0] : vector<24x1xf32> to vector<1xf32>
    %41 = vector.shape_cast %40 : vector<1xf32> to vector<1x1xf32>
    %cst_15 = arith.constant dense<0x7F800000> : vector<1xf32>
    %42 = vector.multi_reduction <minimumf>, %34, %cst_15 [0] : vector<24x1xf32> to vector<1xf32>
    %43 = vector.shape_cast %42 : vector<1xf32> to vector<1x1xf32>
    %44 = arith.subf %41, %43 : vector<1x1xf32>
    %cst_16 = arith.constant dense<0xFF800000> : vector<1xf32>
    %45 = vector.multi_reduction <maximumf>, %39, %cst_16 [0] : vector<24x1xf32> to vector<1xf32>
    %46 = vector.shape_cast %45 : vector<1xf32> to vector<1x1xf32>
    %cst_17 = arith.constant dense<0x7F800000> : vector<1xf32>
    %47 = vector.multi_reduction <minimumf>, %39, %cst_17 [0] : vector<24x1xf32> to vector<1xf32>
    %48 = vector.shape_cast %47 : vector<1xf32> to vector<1x1xf32>
    %49 = arith.subf %46, %48 : vector<1x1xf32>
    %50 = arith.maximumf %44, %49 : vector<1x1xf32>
    %cst_18 = arith.constant 5.000000e-01 : f32
    %51 = vector.broadcast %cst_18 : f32 to vector<1x1xf32>
    %52 = arith.mulf %50, %51 : vector<1x1xf32>
    %53 = tpu.iota {dimensions = array<i32: 1>} : vector<24x2xi32>
    %c0_i32 = arith.constant 0 : i32
    %54 = vector.broadcast %c0_i32 : i32 to vector<24x2xi32>
    %55 = arith.cmpi eq, %53, %54 : vector<24x2xi32>
    %56 = vector.shape_cast %34 : vector<24x1xf32> to vector<24x1xf32>
    %57 = vector.broadcast %56 : vector<24x1xf32> to vector<24x2xf32>
    %58 = vector.shape_cast %39 : vector<24x1xf32> to vector<24x1xf32>
    %59 = vector.broadcast %58 : vector<24x1xf32> to vector<24x2xf32>
    %60 = arith.select %55, %57, %59 : vector<24x2xi1>, vector<24x2xf32>
    %c0_19 = arith.constant 0 : index
    %c0_20 = arith.constant 0 : index
    %61 = vector.load %arg3[%c0_19, %c0_20] : memref<48x24xf32, #tpu.memory_space<vmem>>, vector<48x24xf32>
    %cst_21 = arith.constant dense<0.000000e+00> : vector<48x2xf32>
    %62 = tpu.matmul %61, %60, %cst_21 {dimension_numbers = #tpu.dot_dimension_numbers<[1], [0], [0], [1], [0, 0, 1, 1], [], []>} : vector<48x24xf32>, vector<24x2xf32>, vector<48x2xf32> -> vector<48x2xf32>
    %63 = vector.extract_strided_slice %62 {offsets = [0, 0], sizes = [24, 1], strides = [1, 1]} : vector<48x2xf32> to vector<24x1xf32>
    %64 = arith.subf %63, %34 : vector<24x1xf32>
    %65 = vector.extract_strided_slice %62 {offsets = [0, 1], sizes = [24, 1], strides = [1, 1]} : vector<48x2xf32> to vector<24x1xf32>
    %66 = arith.subf %65, %39 : vector<24x1xf32>
    %67 = vector.extract_strided_slice %62 {offsets = [24, 0], sizes = [24, 1], strides = [1, 1]} : vector<48x2xf32> to vector<24x1xf32>
    %68 = arith.subf %67, %34 : vector<24x1xf32>
    %69 = vector.extract_strided_slice %62 {offsets = [24, 1], sizes = [24, 1], strides = [1, 1]} : vector<48x2xf32> to vector<24x1xf32>
    %70 = arith.subf %69, %39 : vector<24x1xf32>
    %71 = arith.mulf %64, %64 : vector<24x1xf32>
    %72 = arith.mulf %66, %66 : vector<24x1xf32>
    %73 = arith.addf %71, %72 : vector<24x1xf32>
    %74 = math.sqrt %73 : vector<24x1xf32>
    %cst_22 = arith.constant 5.000000e-01 : f32
    %75 = vector.broadcast %cst_22 : f32 to vector<24x1xf32>
    %76 = arith.mulf %74, %75 : vector<24x1xf32>
    %77 = arith.mulf %68, %68 : vector<24x1xf32>
    %78 = arith.mulf %70, %70 : vector<24x1xf32>
    %79 = arith.addf %77, %78 : vector<24x1xf32>
    %80 = math.sqrt %79 : vector<24x1xf32>
    %cst_23 = arith.constant 5.000000e-01 : f32
    %81 = vector.broadcast %cst_23 : f32 to vector<24x1xf32>
    %82 = arith.mulf %80, %81 : vector<24x1xf32>
    %83 = arith.maximumf %76, %82 : vector<24x1xf32>
    %cst_24 = arith.constant 2.000000e+00 : f32
    %84 = vector.broadcast %cst_24 : f32 to vector<24x1xf32>
    %85 = arith.mulf %84, %83 : vector<24x1xf32>
    %86 = tpu.iota {dimensions = array<i32: 0>} : vector<24x1xi32>
    %c0_i32_25 = arith.constant 0 : i32
    %87 = vector.broadcast %c0_i32_25 : i32 to vector<24x1xi32>
    %88 = arith.cmpi eq, %86, %87 : vector<24x1xi32>
    %89 = vector.shape_cast %52 : vector<1x1xf32> to vector<1x1xf32>
    %90 = vector.broadcast %89 : vector<1x1xf32> to vector<24x1xf32>
    %91 = arith.select %88, %90, %85 : vector<24x1xi1>, vector<24x1xf32>
    %c0_26 = arith.constant 0 : index
    %c0_27 = arith.constant 0 : index
    %92 = vector.load %arg4[%c0_26, %c0_27] : memref<24x2xf32, #tpu.memory_space<vmem>>, vector<24x2xf32>
    %93 = vector.extract_strided_slice %92 {offsets = [0, 0], sizes = [24, 1], strides = [1, 1]} : vector<24x2xf32> to vector<24x1xf32>
    %cst_28 = arith.constant 0.000000e+00 : f32
    %94 = vector.broadcast %cst_28 : f32 to vector<24x1xf32>
    %95 = arith.maximumf %93, %94 : vector<24x1xf32>
    %96 = arith.mulf %91, %95 : vector<24x1xf32>
    %97 = vector.extract_strided_slice %92 {offsets = [0, 1], sizes = [24, 1], strides = [1, 1]} : vector<24x2xf32> to vector<24x1xf32>
    %cst_29 = arith.constant 0.000000e+00 : f32
    %98 = vector.broadcast %cst_29 : f32 to vector<24x1xf32>
    %99 = arith.maximumf %97, %98 : vector<24x1xf32>
    %100 = arith.addf %96, %99 : vector<24x1xf32>
    %101 = tpu.iota {dimensions = array<i32: 1>} : vector<24x3xi32>
    %c0_i32_30 = arith.constant 0 : i32
    %102 = vector.broadcast %c0_i32_30 : i32 to vector<24x3xi32>
    %103 = arith.cmpi eq, %101, %102 : vector<24x3xi32>
    %c1_i32 = arith.constant 1 : i32
    %104 = vector.broadcast %c1_i32 : i32 to vector<24x3xi32>
    %105 = arith.cmpi eq, %101, %104 : vector<24x3xi32>
    %106 = vector.shape_cast %39 : vector<24x1xf32> to vector<24x1xf32>
    %107 = vector.broadcast %106 : vector<24x1xf32> to vector<24x3xf32>
    %108 = vector.shape_cast %100 : vector<24x1xf32> to vector<24x1xf32>
    %109 = vector.broadcast %108 : vector<24x1xf32> to vector<24x3xf32>
    %110 = arith.select %105, %107, %109 : vector<24x3xi1>, vector<24x3xf32>
    %111 = vector.shape_cast %34 : vector<24x1xf32> to vector<24x1xf32>
    %112 = vector.broadcast %111 : vector<24x1xf32> to vector<24x3xf32>
    %113 = arith.select %103, %112, %110 : vector<24x3xi1>, vector<24x3xf32>
    %c0_31 = arith.constant 0 : index
    %c0_32 = arith.constant 0 : index
    %c0_33 = arith.constant 0 : index
    %114 = vector.load %arg5[%c0_31, %c0_32, %c0_33] : memref<1x24x3xf32, #tpu.memory_space<vmem>>, vector<1x24x3xf32>
    %115 = vector.shape_cast %114 : vector<1x24x3xf32> to vector<24x3xf32>
    %116 = vector.shape_cast %113 : vector<24x3xf32> to vector<1x24x3xf32>
    tpu.vector_store %arg5[%c0_31, %c0_32, %c0_33], %116 {strides = array<i32>} : memref<1x24x3xf32, #tpu.memory_space<vmem>>, vector<1x24x3xf32>,
    return
  }
  func.func @transform_0(%arg0: i32) -> (i32, i32, i32) {
    %c0_i32 = arith.constant 0 : i32
    %c0_i32_0 = arith.constant 0 : i32
    %c0_i32_1 = arith.constant 0 : i32
    return %arg0, %c0_i32, %c0_i32_0 : i32, i32, i32
  }
  func.func @transform_1(%arg0: i32) -> (i32, i32) {
    %c0_i32 = arith.constant 0 : i32
    %c0_i32_0 = arith.constant 0 : i32
    %c0_i32_1 = arith.constant 0 : i32
    return %c0_i32, %c0_i32_0 : i32, i32
  }
  func.func @transform_2(%arg0: i32) -> (i32, i32) {
    %c0_i32 = arith.constant 0 : i32
    %c0_i32_0 = arith.constant 0 : i32
    %c0_i32_1 = arith.constant 0 : i32
    return %c0_i32, %c0_i32_0 : i32, i32
  }
  func.func @transform_3(%arg0: i32) -> (i32, i32) {
    %c0_i32 = arith.constant 0 : i32
    %c0_i32_0 = arith.constant 0 : i32
    %c0_i32_1 = arith.constant 0 : i32
    return %c0_i32, %c0_i32_0 : i32, i32
  }
  func.func @transform_4(%arg0: i32) -> (i32, i32, i32) {
    %c0_i32 = arith.constant 0 : i32
    %c0_i32_0 = arith.constant 0 : i32
    %c0_i32_1 = arith.constant 0 : i32
    return %arg0, %c0_i32, %c0_i32_0 : i32, i32, i32
  }
}

</mosaic_0001>

<llo_original>
// kernel: iuv_estimator_forward.2
$region0: #{iuv_estimator_forward.2}
  #allocation0 [shape = 'u32[]', space=smem, size = 0x4, offset = 0x4, fixed_abs, tag = 'smem constant byte address 0x4 - core index']
  #allocation1 [shape = 'u32[144,128]{1,0:T(1,128)}', space=vmem, size = 0x12000, scoped, tag = 'internal scratch']
  %s0 = inlined_call_operand.vmem [shape: f32[2,4,256], index: 0, kind: input, shape index: {}]
  %s1 = inlined_call_operand.vmem [shape: f32[128,4], index: 1, kind: input, shape index: {}]
  %s2 = inlined_call_operand.vmem [shape: f32[128,1], index: 2, kind: input, shape index: {}]
  %s3 = inlined_call_operand.vmem [shape: bf16[2,128,256], index: 3, kind: output, shape index: {0}]
  %s4 = inlined_call_operand.vmem [shape: f32[2,24,256], index: 4, kind: output, shape index: {1}]
  %5 = xla_tuple %s3, %s4
  %s6 = sld [smem:[#allocation0]]
  $region53: #{iuv_estimator_forward.2} parent=0
    _
  %s8 = ssub.s32 1, %s6
  %s9 = scalar_select 0, %s8, %s6
  loop: start=0, step=1, limit=4
  $region2: #{iuv_estimator_forward.2} parent=0 // loop_pre_header
    _
  $region3: #{iuv_estimator_forward.2} parent=0 // loop_header
    %s11 = sphi 0, %s15
    %p12 = scmp.ge.s32.totalorder %s11, 4
    %s18 = sphi 0, %s30
    %s19 = sphi 0, %s26
    %s20 = sphi 0, %s18
    %s21 = sphi 0, %s19
    %s22 = sphi 0, %s20
    %s23 = sphi 0, %s21
    %s35 = sphi 0, %s37
    %s38 = sphi 0, %s35
    %s39 = sphi 0, %s38
    %s55 = sphi 0, %s39
    %s59 = sphi 0, %s59
    %s61 = sphi 0, %s59
    %s62 = sphi 0, %s61
    %s76 = sphi 0, %s62
    %s80 = sphi 0, %s80
    %s82 = sphi 0, %s80
    %s83 = sphi 0, %s82
    %s97 = sphi 0, %s83
    %s105 = sphi 0, %s107
    %s108 = sphi 0, %s105
    %s109 = sphi 0, %s108
    %s125 = sphi 0, %s109
    %s133 = sphi 0, %s135
    %s136 = sphi 0, %s133
    %s137 = sphi 0, %s136
    %s153 = sphi 0, %s137
  $region4: #{iuv_estimator_forward.2} parent=0 // loop_header_branch
    %14 = sbr.rel (%p12) target = $region8
  $region5: #{iuv_estimator_forward.2} parent=0 // loop_body
    %s16 = ssub.s32 %s11, 1
    %s17 = ssub.s32 %s11, 2
    %s24 = sadd.s32 1, %s19
    %p25 = scmp.ge.s32.totalorder %s24, 1
    %s26 = scalar_select %p25, 0, %s24
    %s27 = sadd.s32 1, %s18
    %s28 = scalar_select %p25, %s27, %s18
    %p29 = scmp.ge.s32.totalorder %s28, 2
    %s30 = scalar_select %p29, 0, %s28
    %s31 = ssub.s32 %s18, %s30
    %s32 = ssub.s32 %s19, %s26
    %s33 = sor.u32 %s31, %s32
    %p34 = scmp.eq.s32.totalorder %s33, 0
    %s36 = sadd.s32 %s35, 1
    %s37 = scalar_select %p34, %s35, %s36
    %p40 = pneg %p34
    %p41 = scmp.eq.s32.totalorder %s11, 1
    %p42 = por %p40, %p41
    %p43 = scmp.ne.s32.totalorder %s35, %s38
    %p44 = scmp.eq.s32.totalorder %s11, 0
    %p45 = por %p43, %p44
    %p46 = scmp.ne.s32.totalorder %s35, %s38
    %p47 = scmp.eq.s32.totalorder %s16, 1
    %p48 = por %p46, %p47
    %p49 = scmp.ne.s32.totalorder %s38, %s39
    %p50 = scmp.eq.s32.totalorder %s16, 0
    %p51 = por %p49, %p50
    %p52 = scmp.ne.s32.totalorder %s38, %s39
    %p53 = scmp.eq.s32.totalorder %s17, 1
    %p54 = por %p52, %p53
    %p56 = scmp.ne.s32.totalorder %s39, %s55
    %p57 = scmp.eq.s32.totalorder %s17, 0
    %p58 = por %p56, %p57
    %s60 = sadd.s32 %s59, 1
    %p63 = scmp.eq.s32.totalorder %s11, 1
    %p64 = scmp.ne.s32.totalorder %s59, %s61
    %p65 = scmp.eq.s32.totalorder %s11, 0
    %p66 = por %p64, %p65
    %p67 = scmp.ne.s32.totalorder %s59, %s61
    %p68 = scmp.eq.s32.totalorder %s16, 1
    %p69 = por %p67, %p68
    %p70 = scmp.ne.s32.totalorder %s61, %s62
    %p71 = scmp.eq.s32.totalorder %s16, 0
    %p72 = por %p70, %p71
    %p73 = scmp.ne.s32.totalorder %s61, %s62
    %p74 = scmp.eq.s32.totalorder %s17, 1
    %p75 = por %p73, %p74
    %p77 = scmp.ne.s32.totalorder %s62, %s76
    %p78 = scmp.eq.s32.totalorder %s17, 0
    %p79 = por %p77, %p78
    %s81 = sadd.s32 %s80, 1
    %p84 = scmp.eq.s32.totalorder %s11, 1
    %p85 = scmp.ne.s32.totalorder %s80, %s82
    %p86 = scmp.eq.s32.totalorder %s11, 0
    %p87 = por %p85, %p86
    %p88 = scmp.ne.s32.totalorder %s80, %s82
    %p89 = scmp.eq.s32.totalorder %s16, 1
    %p90 = por %p88, %p89
    %p91 = scmp.ne.s32.totalorder %s82, %s83
    %p92 = scmp.eq.s32.totalorder %s16, 0
    %p93 = por %p91, %p92
    %p94 = scmp.ne.s32.totalorder %s82, %s83
    %p95 = scmp.eq.s32.totalorder %s17, 1
    %p96 = por %p94, %p95
    %p98 = scmp.ne.s32.totalorder %s83, %s97
    %p99 = scmp.eq.s32.totalorder %s17, 0
    %p100 = por %p98, %p99
    %s101 = ssub.s32 %s18, %s30
    %s102 = ssub.s32 %s19, %s26
    %s103 = sor.u32 %s101, %s102
    %p104 = scmp.eq.s32.totalorder %s103, 0
    %s106 = sadd.s32 %s105, 1
    %s107 = scalar_select %p104, %s105, %s106
    %p110 = pneg %p104
    %p111 = scmp.eq.s32.totalorder %s11, 1
    %p112 = por %p110, %p111
    %p113 = scmp.ne.s32.totalorder %s105, %s108
    %p114 = scmp.eq.s32.totalorder %s11, 0
    %p115 = por %p113, %p114
    %p116 = scmp.ne.s32.totalorder %s105, %s108
    %p117 = scmp.eq.s32.totalorder %s16, 1
    %p118 = por %p116, %p117
    %p119 = scmp.ne.s32.totalorder %s108, %s109
    %p120 = scmp.eq.s32.totalorder %s16, 0
    %p121 = por %p119, %p120
    %p122 = scmp.ne.s32.totalorder %s108, %s109
    %p123 = scmp.eq.s32.totalorder %s17, 1
    %p124 = por %p122, %p123
    %p126 = scmp.ne.s32.totalorder %s109, %s125
    %p127 = scmp.eq.s32.totalorder %s17, 0
    %p128 = por %p126, %p127
    %s129 = ssub.s32 %s18, %s30
    %s130 = ssub.s32 %s19, %s26
    %s131 = sor.u32 %s129, %s130
    %p132 = scmp.eq.s32.totalorder %s131, 0
    %s134 = sadd.s32 %s133, 1
    %s135 = scalar_select %p132, %s133, %s134
    %p138 = pneg %p132
    %p139 = scmp.eq.s32.totalorder %s11, 1
    %p140 = por %p138, %p139
    %p141 = scmp.ne.s32.totalorder %s133, %s136
    %p142 = scmp.eq.s32.totalorder %s11, 0
    %p143 = por %p141, %p142
    %p144 = scmp.ne.s32.totalorder %s133, %s136
    %p145 = scmp.eq.s32.totalorder %s16, 1
    %p146 = por %p144, %p145
    %p147 = scmp.ne.s32.totalorder %s136, %s137
    %p148 = scmp.eq.s32.totalorder %s16, 0
    %p149 = por %p147, %p148
    %p150 = scmp.ne.s32.totalorder %s136, %s137
    %p151 = scmp.eq.s32.totalorder %s17, 1
    %p152 = por %p150, %p151
    %p154 = scmp.ne.s32.totalorder %s137, %s153
    %p155 = scmp.eq.s32.totalorder %s17, 0
    %p156 = por %p154, %p155
    %p157 = scmp.le.s32.totalorder 1, %s11
    %p158 = scmp.lt.s32.totalorder %s11, 3
    %p159 = pnand %p157, %p158
    %p160 = pneg %p159
    // Predicated region
    $region9: #{iuv_estimator_forward.2} parent=5 // pred_check
      _
    $region10: #{iuv_estimator_forward.2} parent=5 // pred_check_branch
      %162 = sbr.rel (%p159) target = $region12
    $region11: #{iuv_estimator_forward.2} parent=5 // pred_region
      %s163 = ssub.s32 %s11, 1
      // Predicated region
      $region13: #{iuv_estimator_forward.2} parent=11 // pred_check
        %p164 = pneg %p72
      $region14: #{iuv_estimator_forward.2} parent=11 // pred_check_branch
        %166 = sbr.rel (%p164) target = $region16
      $region15: #{iuv_estimator_forward.2} parent=11 // pred_region
        _
      $region16: #{iuv_estimator_forward.2} parent=11 // pred_fallthru
        _
      // Predicated region
      $region17: #{iuv_estimator_forward.2} parent=11 // pred_check
        %p167 = pneg %p93
      $region18: #{iuv_estimator_forward.2} parent=11 // pred_check_branch
        %169 = sbr.rel (%p167) target = $region20
      $region19: #{iuv_estimator_forward.2} parent=11 // pred_region
        _
      $region20: #{iuv_estimator_forward.2} parent=11 // pred_fallthru
        _
    $region12: #{iuv_estimator_forward.2} parent=5 // pred_fallthru
      _
    %p170 = scmp.lt.s32.totalorder %s11, 2
    // Predicated region
    $region21: #{iuv_estimator_forward.2} parent=5 // pred_check
      %p171 = pneg %p170
    $region22: #{iuv_estimator_forward.2} parent=5 // pred_check_branch
      %173 = sbr.rel (%p171) target = $region24
    $region23: #{iuv_estimator_forward.2} parent=5 // pred_region
      // Predicated region
      $region25: #{iuv_estimator_forward.2} parent=23 // pred_check
        %p174 = pneg %p45
      $region26: #{iuv_estimator_forward.2} parent=23 // pred_check_branch
        %176 = sbr.rel (%p174) target = $region28
      $region27: #{iuv_estimator_forward.2} parent=23 // pred_region
        %s177 = smul.u32 2, %s19
        %p178 = scmp.lt.s32.totalorder %s18, 1
        %s179 = scalar_select %p178, %s18, 1
        %p180 = scmp.lt.s32.totalorder %s177, 1
        %s181 = scalar_select %p180, %s177, 1
        %s182 = smul.addr %s179, 2
        %s183 = sadd.s32 %s181, %s182
        %s184 = smul.addr %s183, 4
        %s185 = scalar_lea.vmem %s0, %s184
        %s186 = smul.u32 2, %s19
      $region28: #{iuv_estimator_forward.2} parent=23 // pred_fallthru
        _
    $region24: #{iuv_estimator_forward.2} parent=5 // pred_fallthru
      _
    %p187 = scmp.le.s32.totalorder 1, %s11
    %p188 = scmp.lt.s32.totalorder %s11, 3
    %p189 = pnand %p187, %p188
    %p190 = pneg %p189
    // Predicated region
    $region29: #{iuv_estimator_forward.2} parent=5 // pred_check
      _
    $region30: #{iuv_estimator_forward.2} parent=5 // pred_check_branch
      %192 = sbr.rel (%p189) target = $region32
    $region31: #{iuv_estimator_forward.2} parent=5 // pred_region
      %s193 = ssub.s32 %s11, 1
      %s194 = smul.u32 2, %s21
      %p195 = scmp.lt.s32.totalorder %s20, 1
      %s196 = scalar_select %p195, %s20, 1
      %p197 = scmp.lt.s32.totalorder %s194, 1
      %s198 = scalar_select %p197, %s194, 1
      %s199 = smul.addr %s196, 2
      %s200 = sadd.s32 %s198, %s199
      %s201 = smul.addr %s200, 4
      %s202 = scalar_lea.vmem %s0, %s201
      %p203 = pneg %p51
      %p204 = pneg %p48
      %p205 = pneg %p72
      %p206 = pneg %p69
      %p207 = pneg %p93
      %p208 = pneg %p90
      %p209 = pneg %p121
      %p210 = pneg %p118
      %s211 = smul.u32 2, %s21
      %p212 = scmp.lt.s32.totalorder %s20, 1
      %s213 = scalar_select %p212, %s20, 1
      %p214 = scmp.lt.s32.totalorder %s211, 1
      %s215 = scalar_select %p214, %s211, 1
      %s216 = smul.addr %s213, 32
      %s217 = sadd.s32 %s215, %s216
      %s218 = smul.addr %s217, 4
      %s219 = scalar_lea.vmem %s3, %s218
      %p220 = pneg %p149
      %p221 = pneg %p146
      %s222 = smul.u32 2, %s21
      %p223 = scmp.lt.s32.totalorder %s20, 1
      %s224 = scalar_select %p223, %s20, 1
      %p225 = scmp.lt.s32.totalorder %s222, 1
      %s226 = scalar_select %p225, %s222, 1
      %s227 = smul.addr %s224, 6
      %s228 = sadd.s32 %s226, %s227
      %s229 = smul.addr %s228, 8
      %s230 = scalar_lea.vmem %s4, %s229
      %s231 = smul.u32 2, %s21
      %p232 = scmp.lt.s32.totalorder %s20, 1
      %s233 = scalar_select %p232, %s20, 1
      %p234 = scmp.lt.s32.totalorder %s231, 1
      %s235 = scalar_select %p234, %s231, 1
      %s236 = smul.addr %s233, 2
      %s237 = sadd.s32 %s235, %s236
      %s238 = smul.addr %s237, 4
      %s239 = scalar_lea.vmem %s0, %s238
      %s240 = smul.u32 2, %s21
      %s241 = smul.u32 2, %s21
      %p242 = scmp.lt.s32.totalorder %s20, 1
      %s243 = scalar_select %p242, %s20, 1
      %p244 = scmp.lt.s32.totalorder %s241, 1
      %s245 = scalar_select %p244, %s241, 1
      %s246 = smul.addr %s243, 32
      %s247 = sadd.s32 %s245, %s246
      %s248 = smul.addr %s247, 4
      %s249 = scalar_lea.vmem %s3, %s248
      %s250 = smul.u32 2, %s21
      %s251 = smul.u32 2, %s21
      %p252 = scmp.lt.s32.totalorder %s20, 1
      %s253 = scalar_select %p252, %s20, 1
      %p254 = scmp.lt.s32.totalorder %s251, 1
      %s255 = scalar_select %p254, %s251, 1
      %s256 = smul.addr %s253, 6
      %s257 = sadd.s32 %s255, %s256
      %s258 = smul.addr %s257, 8
      %s259 = scalar_lea.vmem %s4, %s258
      %s260 = smul.u32 2, %s21
      %v261 = vld [vmem:[%s1] sm:$0xff]
      %v262 = vld [vmem:[%s1 + $0x8] sm:$0xff]
      %v263 = vld [vmem:[%s1 + $0x10] sm:$0xff]
      %v264 = vld [vmem:[%s1 + $0x18] sm:$0xff]
      %v265 = vld [vmem:[%s1 + $0x20] sm:$0xff]
      %v266 = vld [vmem:[%s1 + $0x28] sm:$0xff]
      %v267 = vld [vmem:[%s1 + $0x30] sm:$0xff]
      %v268 = vld [vmem:[%s1 + $0x38] sm:$0xff]
      %v269 = vld [vmem:[%s1 + $0x40] sm:$0xff]
      %v270 = vld [vmem:[%s1 + $0x48] sm:$0xff]
      %v271 = vld [vmem:[%s1 + $0x50] sm:$0xff]
      %v272 = vld [vmem:[%s1 + $0x58] sm:$0xff]
      %v273 = vld [vmem:[%s1 + $0x60] sm:$0xff]
      %v274 = vld [vmem:[%s1 + $0x68] sm:$0xff]
      %v275 = vld [vmem:[%s1 + $0x70] sm:$0xff]
      %v276 = vld [vmem:[%s1 + $0x78] sm:$0xff]
      %v277 = vld [vmem:[%s239] sm:$0xff]
      %v278 = vld [vmem:[%s2] sm:$0xff]
      %v279 = vld [vmem:[%s2 + $0x8] sm:$0xff]
      %v280 = vld [vmem:[%s2 + $0x10] sm:$0xff]
      %v281 = vld [vmem:[%s2 + $0x18] sm:$0xff]
      %v282 = vld [vmem:[%s2 + $0x20] sm:$0xff]
      %v283 = vld [vmem:[%s2 + $0x28] sm:$0xff]
      %v284 = vld [vmem:[%s2 + $0x30] sm:$0xff]
      %v285 = vld [vmem:[%s2 + $0x38] sm:$0xff]
      %v286 = vld [vmem:[%s2 + $0x40] sm:$0xff]
      %v287 = vld [vmem:[%s2 + $0x48] sm:$0xff]
      %v288 = vld [vmem:[%s2 + $0x50] sm:$0xff]
      %v289 = vld [vmem:[%s2 + $0x58] sm:$0xff]
      %v290 = vld [vmem:[%s2 + $0x60] sm:$0xff]
      %v291 = vld [vmem:[%s2 + $0x68] sm:$0xff]
      %v292 = vld [vmem:[%s2 + $0x70] sm:$0xff]
      %v293 = vld [vmem:[%s2 + $0x78] sm:$0xff]
      %295 = vset.pattern.permute.xlu0 0
      %296 = vperm.xlu0 %295, %v278
      %v297 = vpop.permute.xlu0 %296
      %300 = vset.pattern.permute.xlu0 0
      %301 = vperm.xlu0 %300, %v279
      %v302 = vpop.permute.xlu0 %301
      %305 = vset.pattern.permute.xlu0 0
      %306 = vperm.xlu0 %305, %v280
      %v307 = vpop.permute.xlu0 %306
      %310 = vset.pattern.permute.xlu0 0
      %311 = vperm.xlu0 %310, %v281
      %v312 = vpop.permute.xlu0 %311
      %315 = vset.pattern.permute.xlu0 0
      %316 = vperm.xlu0 %315, %v282
      %v317 = vpop.permute.xlu0 %316
      %320 = vset.pattern.permute.xlu0 0
      %321 = vperm.xlu0 %320, %v283
      %v322 = vpop.permute.xlu0 %321
      %325 = vset.pattern.permute.xlu0 0
      %326 = vperm.xlu0 %325, %v284
      %v327 = vpop.permute.xlu0 %326
      %330 = vset.pattern.permute.xlu0 0
      %331 = vperm.xlu0 %330, %v285
      %v332 = vpop.permute.xlu0 %331
      %335 = vset.pattern.permute.xlu0 0
      %336 = vperm.xlu0 %335, %v286
      %v337 = vpop.permute.xlu0 %336
      %340 = vset.pattern.permute.xlu0 0
      %341 = vperm.xlu0 %340, %v287
      %v342 = vpop.permute.xlu0 %341
      %345 = vset.pattern.permute.xlu0 0
      %346 = vperm.xlu0 %345, %v288
      %v347 = vpop.permute.xlu0 %346
      %350 = vset.pattern.permute.xlu0 0
      %351 = vperm.xlu0 %350, %v289
      %v352 = vpop.permute.xlu0 %351
      %355 = vset.pattern.permute.xlu0 0
      %356 = vperm.xlu0 %355, %v290
      %v357 = vpop.permute.xlu0 %356
      %360 = vset.pattern.permute.xlu0 0
      %361 = vperm.xlu0 %360, %v291
      %v362 = vpop.permute.xlu0 %361
      %365 = vset.pattern.permute.xlu0 0
      %366 = vperm.xlu0 %365, %v292
      %v367 = vpop.permute.xlu0 %366
      %370 = vset.pattern.permute.xlu0 0
      %371 = vperm.xlu0 %370, %v293
      %v372 = vpop.permute.xlu0 %371
      %v375 = vcombine.high %v277, %v277
      %vm376 = vcmask 31744
      %v378 = vsel %vm376, %v261, 0
      %v381 = vsel %vm376, %v262, 0
      %v384 = vsel %vm376, %v263, 0
      %v387 = vsel %vm376, %v264, 0
      %v390 = vsel %vm376, %v265, 0
      %v393 = vsel %vm376, %v266, 0
      %v396 = vsel %vm376, %v267, 0
      %v399 = vsel %vm376, %v268, 0
      %v402 = vsel %vm376, %v269, 0
      %v405 = vsel %vm376, %v270, 0
      %v408 = vsel %vm376, %v271, 0
      %v411 = vsel %vm376, %v272, 0
      %v414 = vsel %vm376, %v273, 0
      %v417 = vsel %vm376, %v274, 0
      %v420 = vsel %vm376, %v275, 0
      %v423 = vsel %vm376, %v276, 0
      %vm425 = vcmask 1043456
      %v426 = vsel %vm425, %v277, 0
      %v428 = vsel %vm425, %v375, 0
      %430 = vmatprep.subr.mxu0 0.0
      %431 = vmatpush1.msra.mxu0 0.0
      %432 = vmatprep.subr.mxu0 0.0
      %433 = vmatpush1.msra.mxu0 0.0
      %434 = vmatprep.subr.mxu0 0.0
      %435 = vmatpush1.msra.mxu0 0.0
      %436 = vmatprep.subr.mxu0 0.0
      %437 = vmatpush1.msra.mxu0 0.0
      %438 = vmatprep.subr.mxu0 0.0
      %439 = vmatpush1.msra.mxu0 0.0
      %440 = vmatprep.subr.mxu0 0.0
      %441 = vmatpush1.msra.mxu0 0.0
      %442 = vmatprep.subr.mxu0 0.0
      %443 = vmatpush1.msra.mxu0 0.0
      %444 = vmatprep.subr.mxu0 0.0
      %445 = vmatpush1.msra.mxu0 0.0
      %446 = vmatprep.subr.mxu0 0.0
      %447 = vmatpush1.msra.mxu0 0.0
      %448 = vmatprep.subr.mxu0 0.0
      %449 = vmatpush1.msra.mxu0 0.0
      %450 = vmatprep.subr.mxu0 0.0
      %451 = vmatpush1.msra.mxu0 0.0
      %452 = vmatprep.subr.mxu0 0.0
      %453 = vmatpush1.msra.mxu0 0.0
      %454 = vmatprep.subr.mxu0 0.0
      %455 = vmatpush1.msra.mxu0 0.0
      %456 = vmatprep.subr.mxu0 0.0
      %457 = vmatpush1.msra.mxu0 0.0
      %458 = vmatprep.subr.mxu0 0.0
      %459 = vmatpush1.msra.mxu0 0.0
      %460 = vmatprep.subr.mxu0 %v428
      %461 = vmatpush1.msra.mxu0 %v426
      %462 = vmatprep.subr.mxu0 0.0
      %463 = vmatpush2.msra.mxu0 0.0
      %464 = vmatprep.subr.mxu0 0.0
      %465 = vmatpush2.msra.mxu0 0.0
      %466 = vmatprep.subr.mxu0 0.0
      %467 = vmatpush2.msra.mxu0 0.0
      %468 = vmatprep.subr.mxu0 0.0
      %469 = vmatpush2.msra.mxu0 0.0
      %470 = vmatprep.subr.mxu0 0.0
      %471 = vmatpush2.msra.mxu0 0.0
      %472 = vmatprep.subr.mxu0 0.0
      %473 = vmatpush2.msra.mxu0 0.0
      %474 = vmatprep.subr.mxu0 0.0
      %475 = vmatpush2.msra.mxu0 0.0
      %476 = vmatprep.subr.mxu0 0.0
      %477 = vmatpush2.msra.mxu0 0.0
      %478 = vmatprep.subr.mxu0 0.0
      %479 = vmatpush2.msra.mxu0 0.0
      %480 = vmatprep.subr.mxu0 0.0
      %481 = vmatpush2.msra.mxu0 0.0
      %482 = vmatprep.subr.mxu0 0.0
      %483 = vmatpush2.msra.mxu0 0.0
      %484 = vmatprep.subr.mxu0 0.0
      %485 = vmatpush2.msra.mxu0 0.0
      %486 = vmatprep.subr.mxu0 0.0
      %487 = vmatpush2.msra.mxu0 0.0
      %488 = vmatprep.subr.mxu0 0.0
      %489 = vmatpush2.msra.mxu0 0.0
      %490 = vmatprep.subr.mxu0 0.0
      %491 = vmatpush2.msra.mxu0 0.0
      %492 = vmatprep.subr.mxu0 0.0
      %493 = vmatpush2.msra.mxu0 0.0
      %494 = vmatprep.mubr.f32.mxu0 0.0
      %495 = vmatmul.mubr.f32.gmra.mxu0 %v378
      %v496 = vpop.f32.mrf.mxu0
      %v497 = vadd.f32 %v297, %v496
      %v498 = vpop.f32.mrf.mxu0
      %v499 = vadd.f32 %v297, %v498
      %500 = vmatprep.mubr.f32.mxu0 0.0
      %501 = vmatmul.mubr.f32.gmra.mxu0 %v381
      %v502 = vpop.f32.mrf.mxu0
      %v503 = vadd.f32 %v302, %v502
      %v504 = vpop.f32.mrf.mxu0
      %v505 = vadd.f32 %v302, %v504
      %506 = vmatprep.mubr.f32.mxu0 0.0
      %507 = vmatmul.mubr.f32.gmra.mxu0 %v384
      %v508 = vpop.f32.mrf.mxu0
      %v509 = vadd.f32 %v307, %v508
      %v510 = vpop.f32.mrf.mxu0
      %v511 = vadd.f32 %v307, %v510
      %512 = vmatprep.mubr.f32.mxu0 0.0
      %513 = vmatmul.mubr.f32.gmra.mxu0 %v387
      %v514 = vpop.f32.mrf.mxu0
      %v515 = vadd.f32 %v312, %v514
      %v516 = vpop.f32.mrf.mxu0
      %v517 = vadd.f32 %v312, %v516
      %518 = vmatprep.mubr.f32.mxu0 0.0
      %519 = vmatmul.mubr.f32.gmra.mxu0 %v390
      %v520 = vpop.f32.mrf.mxu0
      %v521 = vadd.f32 %v317, %v520
      %v522 = vpop.f32.mrf.mxu0
      %v523 = vadd.f32 %v317, %v522
      %524 = vmatprep.mubr.f32.mxu0 0.0
      %525 = vmatmul.mubr.f32.gmra.mxu0 %v393
      %v526 = vpop.f32.mrf.mxu0
      %v527 = vadd.f32 %v322, %v526
      %v528 = vpop.f32.mrf.mxu0
      %v529 = vadd.f32 %v322, %v528
      %530 = vmatprep.mubr.f32.mxu0 0.0
      %531 = vmatmul.mubr.f32.gmra.mxu0 %v396
      %v532 = vpop.f32.mrf.mxu0
      %v533 = vadd.f32 %v327, %v532
      %v534 = vpop.f32.mrf.mxu0
      %v535 = vadd.f32 %v327, %v534
      %536 = vmatprep.mubr.f32.mxu0 0.0
      %537 = vmatmul.mubr.f32.gmra.mxu0 %v399
      %v538 = vpop.f32.mrf.mxu0
      %v539 = vadd.f32 %v332, %v538
      %v540 = vpop.f32.mrf.mxu0
      %v541 = vadd.f32 %v332, %v540
      %542 = vmatprep.mubr.f32.mxu0 0.0
      %543 = vmatmul.mubr.f32.gmra.mxu0 %v402
      %v544 = vpop.f32.mrf.mxu0
      %v545 = vadd.f32 %v337, %v544
      %v546 = vpop.f32.mrf.mxu0
      %v547 = vadd.f32 %v337, %v546
      %548 = vmatprep.mubr.f32.mxu0 0.0
      %549 = vmatmul.mubr.f32.gmra.mxu0 %v405
      %v550 = vpop.f32.mrf.mxu0
      %v551 = vadd.f32 %v342, %v550
      %v552 = vpop.f32.mrf.mxu0
      %v553 = vadd.f32 %v342, %v552
      %554 = vmatprep.mubr.f32.mxu0 0.0
      %555 = vmatmul.mubr.f32.gmra.mxu0 %v408
      %v556 = vpop.f32.mrf.mxu0
      %v557 = vadd.f32 %v347, %v556
      %v558 = vpop.f32.mrf.mxu0
      %v559 = vadd.f32 %v347, %v558
      %560 = vmatprep.mubr.f32.mxu0 0.0
      %561 = vmatmul.mubr.f32.gmra.mxu0 %v411
      %v562 = vpop.f32.mrf.mxu0
      %v563 = vadd.f32 %v352, %v562
      %v564 = vpop.f32.mrf.mxu0
      %v565 = vadd.f32 %v352, %v564
      %566 = vmatprep.mubr.f32.mxu0 0.0
      %567 = vmatmul.mubr.f32.gmra.mxu0 %v414
      %v568 = vpop.f32.mrf.mxu0
      %v569 = vadd.f32 %v357, %v568
      %v570 = vpop.f32.mrf.mxu0
      %v571 = vadd.f32 %v357, %v570
      %572 = vmatprep.mubr.f32.mxu0 0.0
      %573 = vmatmul.mubr.f32.gmra.mxu0 %v417
      %v574 = vpop.f32.mrf.mxu0
      %v575 = vadd.f32 %v362, %v574
      %v576 = vpop.f32.mrf.mxu0
      %v577 = vadd.f32 %v362, %v576
      %578 = vmatprep.mubr.f32.mxu0 0.0
      %579 = vmatmul.mubr.f32.gmra.mxu0 %v420
      %v580 = vpop.f32.mrf.mxu0
      %v581 = vadd.f32 %v367, %v580
      %v582 = vpop.f32.mrf.mxu0
      %v583 = vadd.f32 %v367, %v582
      %584 = vmatprep.mubr.f32.mxu0 0.0
      %585 = vmatmul.mubr.f32.gmra.mxu0 %v423
      %v586 = vpop.f32.mrf.mxu0
      %v587 = vadd.f32 %v372, %v586
      %v588 = vpop.f32.mrf.mxu0
      %v589 = vadd.f32 %v372, %v588
      %590 = vdwg.mxu0
      %v591 = vpack.c.bf16 %v503, %v497
      %v592 = vpack.c.bf16 %v505, %v499
      %v593 = vpack.c.bf16 %v515, %v509
      %v594 = vpack.c.bf16 %v517, %v511
      %v595 = vpack.c.bf16 %v527, %v521
      %v596 = vpack.c.bf16 %v529, %v523
      %v597 = vpack.c.bf16 %v539, %v533
      %v598 = vpack.c.bf16 %v541, %v535
      %v599 = vpack.c.bf16 %v551, %v545
      %v600 = vpack.c.bf16 %v553, %v547
      %v601 = vpack.c.bf16 %v563, %v557
      %v602 = vpack.c.bf16 %v565, %v559
      %v603 = vpack.c.bf16 %v575, %v569
      %v604 = vpack.c.bf16 %v577, %v571
      %v605 = vpack.c.bf16 %v587, %v581
      %v606 = vpack.c.bf16 %v589, %v583
      %v623 = vunpack.c.l.b16 %v591
      %v624 = vunpack.c.l.b16 %v592
      %v625 = vunpack.c.h.b16 %v591
      %v626 = vunpack.c.h.b16 %v592
      %v627 = vunpack.c.l.b16 %v593
      %v628 = vunpack.c.l.b16 %v594
      %v629 = vunpack.c.h.b16 %v593
      %v630 = vunpack.c.h.b16 %v594
      %v631 = vunpack.c.l.b16 %v595
      %v632 = vunpack.c.l.b16 %v596
      %v633 = vunpack.c.h.b16 %v595
      %v634 = vunpack.c.h.b16 %v596
      %v635 = vunpack.c.l.b16 %v597
      %v636 = vunpack.c.l.b16 %v598
      %v637 = vunpack.c.h.b16 %v597
      %v638 = vunpack.c.h.b16 %v598
      %v639 = vunpack.c.l.b16 %v599
      %v640 = vunpack.c.l.b16 %v600
      %v641 = vunpack.c.h.b16 %v599
      %v642 = vunpack.c.h.b16 %v600
      %v643 = vunpack.c.l.b16 %v601
      %v644 = vunpack.c.l.b16 %v602
      %v645 = vunpack.c.h.b16 %v601
      %v646 = vunpack.c.h.b16 %v602
      %v647 = vunpack.c.l.b16 %v603
      %v648 = vunpack.c.l.b16 %v604
      %v649 = vunpack.c.h.b16 %v603
      %v650 = vunpack.c.h.b16 %v604
      %v651 = vunpack.c.l.b16 %v605
      %v652 = vunpack.c.l.b16 %v606
      %v653 = vunpack.c.h.b16 %v605
      %v654 = vunpack.c.h.b16 %v606
      %v655 = vpack.c.b16 %v624, %v623
      %v656 = vpack.c.b16 %v626, %v625
      %v657 = vpack.c.b16 %v628, %v627
      %v658 = vpack.c.b16 %v630, %v629
      %v659 = vpack.c.b16 %v632, %v631
      %v660 = vpack.c.b16 %v634, %v633
      %v661 = vpack.c.b16 %v636, %v635
      %v662 = vpack.c.b16 %v638, %v637
      %v663 = vpack.c.b16 %v640, %v639
      %v664 = vpack.c.b16 %v642, %v641
      %v665 = vpack.c.b16 %v644, %v643
      %v666 = vpack.c.b16 %v646, %v645
      %v667 = vpack.c.b16 %v648, %v647
      %v668 = vpack.c.b16 %v650, %v649
      %v669 = vpack.c.b16 %v652, %v651
      %v670 = vpack.c.b16 %v654, %v653
      %687 = vst [vmem:[%s249] sm:$0xff] %v655
      %688 = vst [vmem:[%s249 + $0x8] sm:$0xff] %v656
      %689 = vst [vmem:[%s249 + $0x10] sm:$0xff] %v657
      %690 = vst [vmem:[%s249 + $0x18] sm:$0xff] %v658
      %691 = vst [vmem:[%s249 + $0x20] sm:$0xff] %v659
      %692 = vst [vmem:[%s249 + $0x28] sm:$0xff] %v660
      %693 = vst [vmem:[%s249 + $0x30] sm:$0xff] %v661
      %694 = vst [vmem:[%s249 + $0x38] sm:$0xff] %v662
      %695 = vst [vmem:[%s249 + $0x40] sm:$0xff] %v663
      %696 = vst [vmem:[%s249 + $0x48] sm:$0xff] %v664
      %697 = vst [vmem:[%s249 + $0x50] sm:$0xff] %v665
      %698 = vst [vmem:[%s249 + $0x58] sm:$0xff] %v666
      %699 = vst [vmem:[%s249 + $0x60] sm:$0xff] %v667
      %700 = vst [vmem:[%s249 + $0x68] sm:$0xff] %v668
      %701 = vst [vmem:[%s249 + $0x70] sm:$0xff] %v669
      %702 = vst [vmem:[%s249 + $0x78] sm:$0xff] %v670
      %703 = vst [vmem:[%s259] sm:$0xff] %v497
      %704 = vst [vmem:[%s259 + $0x8] sm:$0xff] %v499
      %705 = vst [vmem:[%s259 + $0x10] sm:$0xff] %v503
      %706 = vst [vmem:[%s259 + $0x18] sm:$0xff] %v505
      %707 = vst [vmem:[%s259 + $0x20] sm:$0xff] %v509
      %708 = vst [vmem:[%s259 + $0x28] sm:$0xff] %v511
      %s709 = smul.u32 2, %s21
      %p710 = scmp.lt.s32.totalorder %s20, 1
      %s711 = scalar_select %p710, %s20, 1
      %p712 = scmp.lt.s32.totalorder %s709, 1
      %s713 = scalar_select %p712, %s709, 1
      %s714 = smul.addr %s711, 32
      %s715 = sadd.s32 %s713, %s714
      %s716 = smul.addr %s715, 4
      %s717 = scalar_lea.vmem %s3, %s716
      %s718 = smul.u32 2, %s21
      %p719 = scmp.lt.s32.totalorder %s20, 1
      %s720 = scalar_select %p719, %s20, 1
      %p721 = scmp.lt.s32.totalorder %s718, 1
      %s722 = scalar_select %p721, %s718, 1
      %s723 = smul.addr %s720, 6
      %s724 = sadd.s32 %s722, %s723
      %s725 = smul.addr %s724, 8
      %s726 = scalar_lea.vmem %s4, %s725
      // Predicated region
      $region33: #{iuv_estimator_forward.2} parent=31 // pred_check
        %p727 = pneg %p118
      $region34: #{iuv_estimator_forward.2} parent=31 // pred_check_branch
        %729 = sbr.rel (%p727) target = $region36
      $region35: #{iuv_estimator_forward.2} parent=31 // pred_region
        %s730 = smul.u32 2, %s21
      $region36: #{iuv_estimator_forward.2} parent=31 // pred_fallthru
        _
      // Predicated region
      $region37: #{iuv_estimator_forward.2} parent=31 // pred_check
        %p731 = pneg %p146
      $region38: #{iuv_estimator_forward.2} parent=31 // pred_check_branch
        %733 = sbr.rel (%p731) target = $region40
      $region39: #{iuv_estimator_forward.2} parent=31 // pred_region
        %s734 = smul.u32 2, %s21
      $region40: #{iuv_estimator_forward.2} parent=31 // pred_fallthru
        _
    $region32: #{iuv_estimator_forward.2} parent=5 // pred_fallthru
      _
    %p735 = scmp.le.s32.totalorder 2, %s11
    // Predicated region
    $region41: #{iuv_estimator_forward.2} parent=5 // pred_check
      %p736 = pneg %p735
    $region42: #{iuv_estimator_forward.2} parent=5 // pred_check_branch
      %738 = sbr.rel (%p736) target = $region44
    $region43: #{iuv_estimator_forward.2} parent=5 // pred_region
      %s739 = ssub.s32 %s11, 2
      // Predicated region
      $region45: #{iuv_estimator_forward.2} parent=43 // pred_check
        %p740 = pneg %p124
      $region46: #{iuv_estimator_forward.2} parent=43 // pred_check_branch
        %742 = sbr.rel (%p740) target = $region48
      $region47: #{iuv_estimator_forward.2} parent=43 // pred_region
        %s743 = smul.u32 2, %s23
        %p744 = scmp.lt.s32.totalorder %s22, 1
        %s745 = scalar_select %p744, %s22, 1
        %p746 = scmp.lt.s32.totalorder %s743, 1
        %s747 = scalar_select %p746, %s743, 1
        %s748 = smul.addr %s745, 32
        %s749 = sadd.s32 %s747, %s748
        %s750 = smul.addr %s749, 4
        %s751 = scalar_lea.vmem %s3, %s750
      $region48: #{iuv_estimator_forward.2} parent=43 // pred_fallthru
        _
      // Predicated region
      $region49: #{iuv_estimator_forward.2} parent=43 // pred_check
        %p752 = pneg %p152
      $region50: #{iuv_estimator_forward.2} parent=43 // pred_check_branch
        %754 = sbr.rel (%p752) target = $region52
      $region51: #{iuv_estimator_forward.2} parent=43 // pred_region
        %s755 = smul.u32 2, %s23
        %p756 = scmp.lt.s32.totalorder %s22, 1
        %s757 = scalar_select %p756, %s22, 1
        %p758 = scmp.lt.s32.totalorder %s755, 1
        %s759 = scalar_select %p758, %s755, 1
        %s760 = smul.addr %s757, 6
        %s761 = sadd.s32 %s759, %s760
        %s762 = smul.addr %s761, 8
        %s763 = scalar_lea.vmem %s4, %s762
      $region52: #{iuv_estimator_forward.2} parent=43 // pred_fallthru
        _
    $region44: #{iuv_estimator_forward.2} parent=5 // pred_fallthru
      _
  $region6: #{iuv_estimator_forward.2} parent=0 // loop_footer
    %s15 = sadd.s32 1, %s11
  $region7: #{iuv_estimator_forward.2} parent=0 // loop_footer_branch
    %10 = sbr.rel target = $region3
  $region8: #{iuv_estimator_forward.2} parent=0 // loop_exit
    _

// kernel: iuv_estimator_forward.3
$region0: #{iuv_estimator_forward.3}
  #allocation0 [shape = 'u32[]', space=smem, size = 0x4, offset = 0x4, fixed_abs, tag = 'smem constant byte address 0x4 - core index']
  #allocation1 [shape = 'u32[144,128]{1,0:T(1,128)}', space=vmem, size = 0x12000, scoped, tag = 'internal scratch']
  %s0 = inlined_call_operand.vmem [shape: f32[2,24,256], index: 0, kind: input, shape index: {}]
  %s1 = inlined_call_operand.vmem [shape: f32[8,256], index: 1, kind: input, shape index: {}]
  %s2 = inlined_call_operand.vmem [shape: f32[48,24], index: 2, kind: input, shape index: {}]
  %s3 = inlined_call_operand.vmem [shape: f32[24,2], index: 3, kind: input, shape index: {}]
  %s4 = inlined_call_operand.vmem [shape: f32[2,24,3], index: 4, kind: output, shape index: {}]
  %s5 = sld [smem:[#allocation0]]
  $region49: #{iuv_estimator_forward.3} parent=0
    _
  %s7 = ssub.s32 1, %s5
  %s8 = scalar_select 0, %s7, %s5
  loop: start=0, step=1, limit=4
  $region2: #{iuv_estimator_forward.3} parent=0 // loop_pre_header
    _
  $region3: #{iuv_estimator_forward.3} parent=0 // loop_header
    %s10 = sphi 0, %s14
    %p11 = scmp.ge.s32.totalorder %s10, 4
    %s20 = sphi 0, %s22
    %s23 = sphi 0, %s20
    %s24 = sphi 0, %s23
    %s40 = sphi 0, %s24
    %s44 = sphi 0, %s44
    %s46 = sphi 0, %s44
    %s47 = sphi 0, %s46
    %s61 = sphi 0, %s47
    %s65 = sphi 0, %s65
    %s67 = sphi 0, %s65
    %s68 = sphi 0, %s67
    %s82 = sphi 0, %s68
    %s86 = sphi 0, %s86
    %s88 = sphi 0, %s86
    %s89 = sphi 0, %s88
    %s103 = sphi 0, %s89
    %s109 = sphi 0, %s111
    %s112 = sphi 0, %s109
    %s113 = sphi 0, %s112
    %s129 = sphi 0, %s113
  $region4: #{iuv_estimator_forward.3} parent=0 // loop_header_branch
    %13 = sbr.rel (%p11) target = $region8
  $region5: #{iuv_estimator_forward.3} parent=0 // loop_body
    %s15 = ssub.s32 %s10, 1
    %s16 = ssub.s32 %s10, 2
    %s17 = sadd.s32 %s10, 1
    %s18 = ssub.s32 %s10, %s17
    %p19 = scmp.eq.s32.totalorder %s18, 0
    %s21 = sadd.s32 %s20, 1
    %s22 = scalar_select %p19, %s20, %s21
    %p25 = pneg %p19
    %p26 = scmp.eq.s32.totalorder %s10, 1
    %p27 = por %p25, %p26
    %p28 = scmp.ne.s32.totalorder %s20, %s23
    %p29 = scmp.eq.s32.totalorder %s10, 0
    %p30 = por %p28, %p29
    %p31 = scmp.ne.s32.totalorder %s20, %s23
    %p32 = scmp.eq.s32.totalorder %s15, 1
    %p33 = por %p31, %p32
    %p34 = scmp.ne.s32.totalorder %s23, %s24
    %p35 = scmp.eq.s32.totalorder %s15, 0
    %p36 = por %p34, %p35
    %p37 = scmp.ne.s32.totalorder %s23, %s24
    %p38 = scmp.eq.s32.totalorder %s16, 1
    %p39 = por %p37, %p38
    %p41 = scmp.ne.s32.totalorder %s24, %s40
    %p42 = scmp.eq.s32.totalorder %s16, 0
    %p43 = por %p41, %p42
    %s45 = sadd.s32 %s44, 1
    %p48 = scmp.eq.s32.totalorder %s10, 1
    %p49 = scmp.ne.s32.totalorder %s44, %s46
    %p50 = scmp.eq.s32.totalorder %s10, 0
    %p51 = por %p49, %p50
    %p52 = scmp.ne.s32.totalorder %s44, %s46
    %p53 = scmp.eq.s32.totalorder %s15, 1
    %p54 = por %p52, %p53
    %p55 = scmp.ne.s32.totalorder %s46, %s47
    %p56 = scmp.eq.s32.totalorder %s15, 0
    %p57 = por %p55, %p56
    %p58 = scmp.ne.s32.totalorder %s46, %s47
    %p59 = scmp.eq.s32.totalorder %s16, 1
    %p60 = por %p58, %p59
    %p62 = scmp.ne.s32.totalorder %s47, %s61
    %p63 = scmp.eq.s32.totalorder %s16, 0
    %p64 = por %p62, %p63
    %s66 = sadd.s32 %s65, 1
    %p69 = scmp.eq.s32.totalorder %s10, 1
    %p70 = scmp.ne.s32.totalorder %s65, %s67
    %p71 = scmp.eq.s32.totalorder %s10, 0
    %p72 = por %p70, %p71
    %p73 = scmp.ne.s32.totalorder %s65, %s67
    %p74 = scmp.eq.s32.totalorder %s15, 1
    %p75 = por %p73, %p74
    %p76 = scmp.ne.s32.totalorder %s67, %s68
    %p77 = scmp.eq.s32.totalorder %s15, 0
    %p78 = por %p76, %p77
    %p79 = scmp.ne.s32.totalorder %s67, %s68
    %p80 = scmp.eq.s32.totalorder %s16, 1
    %p81 = por %p79, %p80
    %p83 = scmp.ne.s32.totalorder %s68, %s82
    %p84 = scmp.eq.s32.totalorder %s16, 0
    %p85 = por %p83, %p84
    %s87 = sadd.s32 %s86, 1
    %p90 = scmp.eq.s32.totalorder %s10, 1
    %p91 = scmp.ne.s32.totalorder %s86, %s88
    %p92 = scmp.eq.s32.totalorder %s10, 0
    %p93 = por %p91, %p92
    %p94 = scmp.ne.s32.totalorder %s86, %s88
    %p95 = scmp.eq.s32.totalorder %s15, 1
    %p96 = por %p94, %p95
    %p97 = scmp.ne.s32.totalorder %s88, %s89
    %p98 = scmp.eq.s32.totalorder %s15, 0
    %p99 = por %p97, %p98
    %p100 = scmp.ne.s32.totalorder %s88, %s89
    %p101 = scmp.eq.s32.totalorder %s16, 1
    %p102 = por %p100, %p101
    %p104 = scmp.ne.s32.totalorder %s89, %s103
    %p105 = scmp.eq.s32.totalorder %s16, 0
    %p106 = por %p104, %p105
    %s107 = ssub.s32 %s10, %s17
    %p108 = scmp.eq.s32.totalorder %s107, 0
    %s110 = sadd.s32 %s109, 1
    %s111 = scalar_select %p108, %s109, %s110
    %p114 = pneg %p108
    %p115 = scmp.eq.s32.totalorder %s10, 1
    %p116 = por %p114, %p115
    %p117 = scmp.ne.s32.totalorder %s109, %s112
    %p118 = scmp.eq.s32.totalorder %s10, 0
    %p119 = por %p117, %p118
    %p120 = scmp.ne.s32.totalorder %s109, %s112
    %p121 = scmp.eq.s32.totalorder %s15, 1
    %p122 = por %p120, %p121
    %p123 = scmp.ne.s32.totalorder %s112, %s113
    %p124 = scmp.eq.s32.totalorder %s15, 0
    %p125 = por %p123, %p124
    %p126 = scmp.ne.s32.totalorder %s112, %s113
    %p127 = scmp.eq.s32.totalorder %s16, 1
    %p128 = por %p126, %p127
    %p130 = scmp.ne.s32.totalorder %s113, %s129
    %p131 = scmp.eq.s32.totalorder %s16, 0
    %p132 = por %p130, %p131
    %p133 = scmp.le.s32.totalorder 1, %s10
    %p134 = scmp.lt.s32.totalorder %s10, 3
    %p135 = pnand %p133, %p134
    %p136 = pneg %p135
    // Predicated region
    $region9: #{iuv_estimator_forward.3} parent=5 // pred_check
      _
    $region10: #{iuv_estimator_forward.3} parent=5 // pred_check_branch
      %138 = sbr.rel (%p135) target = $region12
    $region11: #{iuv_estimator_forward.3} parent=5 // pred_region
      %s139 = ssub.s32 %s10, 1
      // Predicated region
      $region13: #{iuv_estimator_forward.3} parent=11 // pred_check
        %p140 = pneg %p57
      $region14: #{iuv_estimator_forward.3} parent=11 // pred_check_branch
        %142 = sbr.rel (%p140) target = $region16
      $region15: #{iuv_estimator_forward.3} parent=11 // pred_region
        _
      $region16: #{iuv_estimator_forward.3} parent=11 // pred_fallthru
        _
      // Predicated region
      $region17: #{iuv_estimator_forward.3} parent=11 // pred_check
        %p143 = pneg %p78
      $region18: #{iuv_estimator_forward.3} parent=11 // pred_check_branch
        %145 = sbr.rel (%p143) target = $region20
      $region19: #{iuv_estimator_forward.3} parent=11 // pred_region
        _
      $region20: #{iuv_estimator_forward.3} parent=11 // pred_fallthru
        _
      // Predicated region
      $region21: #{iuv_estimator_forward.3} parent=11 // pred_check
        %p146 = pneg %p99
      $region22: #{iuv_estimator_forward.3} parent=11 // pred_check_branch
        %148 = sbr.rel (%p146) target = $region24
      $region23: #{iuv_estimator_forward.3} parent=11 // pred_region
        _
      $region24: #{iuv_estimator_forward.3} parent=11 // pred_fallthru
        _
    $region12: #{iuv_estimator_forward.3} parent=5 // pred_fallthru
      _
    %p149 = scmp.lt.s32.totalorder %s10, 2
    // Predicated region
    $region25: #{iuv_estimator_forward.3} parent=5 // pred_check
      %p150 = pneg %p149
    $region26: #{iuv_estimator_forward.3} parent=5 // pred_check_branch
      %152 = sbr.rel (%p150) target = $region28
    $region27: #{iuv_estimator_forward.3} parent=5 // pred_region
      // Predicated region
      $region29: #{iuv_estimator_forward.3} parent=27 // pred_check
        %p153 = pneg %p30
      $region30: #{iuv_estimator_forward.3} parent=27 // pred_check_branch
        %155 = sbr.rel (%p153) target = $region32
      $region31: #{iuv_estimator_forward.3} parent=27 // pred_region
        %p156 = scmp.lt.s32.totalorder %s10, 1
        %s157 = scalar_select %p156, %s10, 1
        %s158 = smul.addr %s157, 6
        %s159 = smul.addr %s158, 8
        %s160 = scalar_lea.vmem %s0, %s159
      $region32: #{iuv_estimator_forward.3} parent=27 // pred_fallthru
        _
    $region28: #{iuv_estimator_forward.3} parent=5 // pred_fallthru
      _
    %p161 = scmp.le.s32.totalorder 1, %s10
    %p162 = scmp.lt.s32.totalorder %s10, 3
    %p163 = pnand %p161, %p162
    %p164 = pneg %p163
    // Predicated region
    $region33: #{iuv_estimator_forward.3} parent=5 // pred_check
      _
    $region34: #{iuv_estimator_forward.3} parent=5 // pred_check_branch
      %166 = sbr.rel (%p163) target = $region36
    $region35: #{iuv_estimator_forward.3} parent=5 // pred_region
      %s167 = ssub.s32 %s10, 1
      %p168 = scmp.lt.s32.totalorder %s15, 1
      %s169 = scalar_select %p168, %s15, 1
      %s170 = smul.addr %s169, 6
      %s171 = smul.addr %s170, 8
      %s172 = scalar_lea.vmem %s0, %s171
      %p173 = pneg %p36
      %p174 = pneg %p33
      %p175 = pneg %p57
      %p176 = pneg %p54
      %p177 = pneg %p78
      %p178 = pneg %p75
      %p179 = pneg %p99
      %p180 = pneg %p96
      %p181 = pneg %p125
      %p182 = pneg %p122
      %p183 = scmp.lt.s32.totalorder %s15, 1
      %s184 = scalar_select %p183, %s15, 1
      %s185 = smul.addr %s184, 3
      %s186 = smul.addr %s185, 8
      %s187 = scalar_lea.vmem %s4, %s186
      %p188 = scmp.lt.s32.totalorder %s15, 1
      %s189 = scalar_select %p188, %s15, 1
      %s190 = smul.addr %s189, 6
      %s191 = smul.addr %s190, 8
      %s192 = scalar_lea.vmem %s0, %s191
      %p193 = scmp.lt.s32.totalorder %s15, 1
      %s194 = scalar_select %p193, %s15, 1
      %s195 = smul.addr %s194, 3
      %s196 = smul.addr %s195, 8
      %s197 = scalar_lea.vmem %s4, %s196
      %v198 = vld [vmem:[%s1] sm:$0xff]
      %v199 = vld [vmem:[%s1 + $0x8] sm:$0xff]
      %v200 = vld [vmem:[%s192] sm:$0xff]
      %v201 = vld [vmem:[%s192 + $0x8] sm:$0xff]
      %v202 = vld [vmem:[%s192 + $0x10] sm:$0xff]
      %v203 = vld [vmem:[%s192 + $0x18] sm:$0xff]
      %v204 = vld [vmem:[%s192 + $0x20] sm:$0xff]
      %v205 = vld [vmem:[%s192 + $0x28] sm:$0xff]
      %v206 = vmul.f32 %v200, 10.0
      %v207 = vmul.f32 %v201, 10.0
      %v208 = vmul.f32 %v202, 10.0
      %v209 = vmul.f32 %v203, 10.0
      %v210 = vmul.f32 %v204, 10.0
      %v211 = vmul.f32 %v205, 10.0
      %vm212 = vcmp.gt.f32.partialorder %v198, 0.0
      %vm213 = vcmp.gt.f32.partialorder %v199, 0.0
      %v214 = vsel %vm212, 1, 0
      %v215 = vsel %vm213, 1, 0
      %v216 = vlaneseq
      %v217 = vshrl.u32 %v216, 7
      %v218 = vsub.s32 2, %v217
      %v219 = vrot.slane %v214, %v218
      %v220 = vlaneseq
      %v221 = vshrl.u32 %v220, 7
      %v222 = vsub.s32 2, %v221
      %v223 = vrot.slane %v215, %v222
      %vm224 = vcmp.eq.s32.totalorder %v219, 1
      %vm225 = vcmp.eq.s32.totalorder %v223, 1
      %v226 = vsel %vm224, %v206, -1e+30
      %v227 = vsel %vm225, %v207, -1e+30
      %v228 = vsel %vm224, %v208, -1e+30
      %v229 = vsel %vm225, %v209, -1e+30
      %v230 = vsel %vm224, %v210, -1e+30
      %v231 = vsel %vm225, %v211, -1e+30
      %v232 = vmax.f32 %v226, %v227
      %233 = vmax.xlane.f32.xlu0 %v232
      %v234 = vpop.xlane.xlu0 %233
      %v235 = vmax.f32 %v228, %v229
      %236 = vmax.xlane.f32.xlu0 %v235
      %v237 = vpop.xlane.xlu0 %236
      %v238 = vmax.f32 %v230, %v231
      %239 = vmax.xlane.f32.xlu0 %v238
      %v240 = vpop.xlane.xlu0 %239
      %v241 = vsub.f32 %v226, %v234
      %v242 = vsub.f32 %v227, %v234
      %v243 = vsub.f32 %v228, %v237
      %v244 = vsub.f32 %v229, %v237
      %v245 = vsub.f32 %v230, %v240
      %v246 = vsub.f32 %v231, %v240
      %v247 = vmul.f32 %v241, 1.442695
      %v248 = vpow.pop %v247
      %v249 = vmul.f32 %v242, 1.442695
      %v250 = vpow.pop %v249
      %v251 = vmul.f32 %v243, 1.442695
      %v252 = vpow.pop %v251
      %v253 = vmul.f32 %v244, 1.442695
      %v254 = vpow.pop %v253
      %v255 = vmul.f32 %v245, 1.442695
      %v256 = vpow.pop %v255
      %v257 = vmul.f32 %v246, 1.442695
      %v258 = vpow.pop %v257
      %v259 = vadd.f32 %v248, %v250
      %260 = vadd.xlane.f32.xlu0 %v259
      %v261 = vpop.xlane.xlu0 %260
      %v262 = vadd.f32 %v252, %v254
      %263 = vadd.xlane.f32.xlu0 %v262
      %v264 = vpop.xlane.xlu0 %263
      %v265 = vadd.f32 %v256, %v258
      %266 = vadd.xlane.f32.xlu0 %v265
      %v267 = vpop.xlane.xlu0 %266
      %v268 = vlaneseq
      %v269 = vshrl.u32 %v268, 7
      %v270 = vsub.s32 0, %v269
      %v271 = vrot.slane %v198, %v270
      %v272 = vlaneseq
      %v273 = vshrl.u32 %v272, 7
      %v274 = vsub.s32 0, %v273
      %v275 = vrot.slane %v199, %v274
      %v276 = vmul.f32 %v248, %v271
      %v277 = vmul.f32 %v250, %v275
      %v278 = vmul.f32 %v252, %v271
      %v279 = vmul.f32 %v254, %v275
      %v280 = vmul.f32 %v256, %v271
      %v281 = vmul.f32 %v258, %v275
      %v282 = vadd.f32 %v276, %v277
      %283 = vadd.xlane.f32.xlu0 %v282
      %v284 = vpop.xlane.xlu0 %283
      %v285 = vadd.f32 %v278, %v279
      %286 = vadd.xlane.f32.xlu0 %v285
      %v287 = vpop.xlane.xlu0 %286
      %v288 = vadd.f32 %v280, %v281
      %289 = vadd.xlane.f32.xlu0 %v288
      %v290 = vpop.xlane.xlu0 %289
      %v291 = vlaneseq
      %v292 = vshrl.u32 %v291, 7
      %v293 = vsub.s32 1, %v292
      %v294 = vrot.slane %v198, %v293
      %v295 = vlaneseq
      %v296 = vshrl.u32 %v295, 7
      %v297 = vsub.s32 1, %v296
      %v298 = vrot.slane %v199, %v297
      %v299 = vmul.f32 %v248, %v294
      %v300 = vmul.f32 %v250, %v298
      %v301 = vmul.f32 %v252, %v294
      %v302 = vmul.f32 %v254, %v298
      %v303 = vmul.f32 %v256, %v294
      %v304 = vmul.f32 %v258, %v298
      %v305 = vadd.f32 %v299, %v300
      %306 = vadd.xlane.f32.xlu0 %v305
      %v307 = vpop.xlane.xlu0 %306
      %v308 = vadd.f32 %v301, %v302
      %309 = vadd.xlane.f32.xlu0 %v308
      %v310 = vpop.xlane.xlu0 %309
      %v311 = vadd.f32 %v303, %v304
      %312 = vadd.xlane.f32.xlu0 %v311
      %v313 = vpop.xlane.xlu0 %312
      %v314 = vrcp.pop %v261
      %v315 = vrcp.pop %v264
      %v316 = vrcp.pop %v267
      %v317 = vmul.f32 %v284, %v314
      %v318 = vmul.f32 %v287, %v315
      %v319 = vmul.f32 %v290, %v316
      %v320 = vmul.f32 %v317, 0.125
      %v321 = vmul.f32 %v318, 0.125
      %v322 = vmul.f32 %v319, 0.125
      %v323 = vsub.f32 %v320, 1.0
      %v324 = vsub.f32 %v321, 1.0
      %v325 = vsub.f32 %v322, 1.0
      %v326 = vmul.f32 %v307, %v314
      %v327 = vmul.f32 %v310, %v315
      %v328 = vmul.f32 %v313, %v316
      %v329 = vmul.f32 %v326, 0.125
      %v330 = vmul.f32 %v327, 0.125
      %v331 = vmul.f32 %v328, 0.125
      %v332 = vsub.f32 %v329, 1.0
      %v333 = vsub.f32 %v330, 1.0
      %v334 = vsub.f32 %v331, 1.0
      %v335 = vmax.f32 %v323, %v324
      %v336 = vmax.f32 %v335, %v325
      %v337 = vrot.slane %v336, 4
      %v338 = vmax.f32 %v336, %v337
      %v339 = vrot.slane %v338, 2
      %v340 = vmax.f32 %v338, %v339
      %v341 = vrot.slane %v340, 1
      %v342 = vmax.f32 %v340, %v341
      %v343 = vmin.f32 %v323, %v324
      %v344 = vmin.f32 %v343, %v325
      %v345 = vrot.slane %v344, 4
      %v346 = vmin.f32 %v344, %v345
      %v347 = vrot.slane %v346, 2
      %v348 = vmin.f32 %v346, %v347
      %v349 = vrot.slane %v348, 1
      %v350 = vmin.f32 %v348, %v349
      %v351 = vsub.f32 %v342, %v350
      %v352 = vmax.f32 %v332, %v333
      %v353 = vmax.f32 %v352, %v334
      %v354 = vrot.slane %v353, 4
      %v355 = vmax.f32 %v353, %v354
      %v356 = vrot.slane %v355, 2
      %v357 = vmax.f32 %v355, %v356
      %v358 = vrot.slane %v357, 1
      %v359 = vmax.f32 %v357, %v358
      %v360 = vmin.f32 %v332, %v333
      %v361 = vmin.f32 %v360, %v334
      %v362 = vrot.slane %v361, 4
      %v363 = vmin.f32 %v361, %v362
      %v364 = vrot.slane %v363, 2
      %v365 = vmin.f32 %v363, %v364
      %v366 = vrot.slane %v365, 1
      %v367 = vmin.f32 %v365, %v366
      %v368 = vsub.f32 %v359, %v367
      %v369 = vmax.f32 %v351, %v368
      %v370 = vmul.f32 %v369, 0.5
      %v371 = vlaneseq
      %v372 = vand.u32 %v371, 127
      %vm373 = vcmp.eq.s32.totalorder %v372, 0
      %v374 = vsel %vm373, %v323, %v332
      %v375 = vsel %vm373, %v324, %v333
      %v376 = vsel %vm373, %v325, %v334
      %v377 = vld [vmem:[%s2] sm:$0xff]
      %v378 = vld [vmem:[%s2 + $0x8] sm:$0xff]
      %v379 = vld [vmem:[%s2 + $0x10] sm:$0xff]
      %v380 = vld [vmem:[%s2 + $0x18] sm:$0xff]
      %v381 = vld [vmem:[%s2 + $0x20] sm:$0xff]
      %v382 = vld [vmem:[%s2 + $0x28] sm:$0xff]
      %vm383 = vcmask 195584
      %v385 = vsel %vm383, %v377, 0
      %v388 = vsel %vm383, %v378, 0
      %v391 = vsel %vm383, %v379, 0
      %v394 = vsel %vm383, %v380, 0
      %v397 = vsel %vm383, %v381, 0
      %v400 = vsel %vm383, %v382, 0
      %402 = vmatprep.subr.mxu0 0.0
      %403 = vmatpush1.msra.mxu0 0.0
      %404 = vmatprep.subr.mxu0 0.0
      %405 = vmatpush1.msra.mxu0 0.0
      %406 = vmatprep.subr.mxu0 0.0
      %407 = vmatpush1.msra.mxu0 0.0
      %408 = vmatprep.subr.mxu0 0.0
      %409 = vmatpush1.msra.mxu0 0.0
      %410 = vmatprep.subr.mxu0 0.0
      %411 = vmatpush1.msra.mxu0 0.0
      %412 = vmatprep.subr.mxu0 0.0
      %413 = vmatpush1.msra.mxu0 0.0
      %414 = vmatprep.subr.mxu0 0.0
      %415 = vmatpush1.msra.mxu0 0.0
      %416 = vmatprep.subr.mxu0 0.0
      %417 = vmatpush1.msra.mxu0 0.0
      %418 = vmatprep.subr.mxu0 0.0
      %419 = vmatpush1.msra.mxu0 0.0
      %420 = vmatprep.subr.mxu0 0.0
      %421 = vmatpush1.msra.mxu0 0.0
      %422 = vmatprep.subr.mxu0 0.0
      %423 = vmatpush1.msra.mxu0 0.0
      %424 = vmatprep.subr.mxu0 0.0
      %425 = vmatpush1.msra.mxu0 0.0
      %426 = vmatprep.subr.mxu0 0.0
      %427 = vmatpush1.msra.mxu0 0.0
      %428 = vmatprep.subr.mxu0 0.0
      %429 = vmatpush1.msra.mxu0 %v376
      %430 = vmatprep.subr.mxu0 0.0
      %431 = vmatpush1.msra.mxu0 %v375
      %432 = vmatprep.subr.mxu0 0.0
      %433 = vmatpush1.msra.mxu0 %v374
      %434 = vmatprep.subr.mxu0 0.0
      %435 = vmatpush2.msra.mxu0 0.0
      %436 = vmatprep.subr.mxu0 0.0
      %437 = vmatpush2.msra.mxu0 0.0
      %438 = vmatprep.subr.mxu0 0.0
      %439 = vmatpush2.msra.mxu0 0.0
      %440 = vmatprep.subr.mxu0 0.0
      %441 = vmatpush2.msra.mxu0 0.0
      %442 = vmatprep.subr.mxu0 0.0
      %443 = vmatpush2.msra.mxu0 0.0
      %444 = vmatprep.subr.mxu0 0.0
      %445 = vmatpush2.msra.mxu0 0.0
      %446 = vmatprep.subr.mxu0 0.0
      %447 = vmatpush2.msra.mxu0 0.0
      %448 = vmatprep.subr.mxu0 0.0
      %449 = vmatpush2.msra.mxu0 0.0
      %450 = vmatprep.subr.mxu0 0.0
      %451 = vmatpush2.msra.mxu0 0.0
      %452 = vmatprep.subr.mxu0 0.0
      %453 = vmatpush2.msra.mxu0 0.0
      %454 = vmatprep.subr.mxu0 0.0
      %455 = vmatpush2.msra.mxu0 0.0
      %456 = vmatprep.subr.mxu0 0.0
      %457 = vmatpush2.msra.mxu0 0.0
      %458 = vmatprep.subr.mxu0 0.0
      %459 = vmatpush2.msra.mxu0 0.0
      %460 = vmatprep.subr.mxu0 0.0
      %461 = vmatpush2.msra.mxu0 0.0
      %462 = vmatprep.subr.mxu0 0.0
      %463 = vmatpush2.msra.mxu0 0.0
      %464 = vmatprep.subr.mxu0 0.0
      %465 = vmatpush2.msra.mxu0 0.0
      %466 = vmatprep.mubr.f32.mxu0 0.0
      %467 = vmatmul.mubr.f32.gmra.mxu0 %v385
      %v468 = vpop.f32.mrf.mxu0
      %v469 = vadd.f32 0.0, %v468
      %v470 = vpop.f32.mrf.mxu0
      %471 = vmatprep.mubr.f32.mxu0 0.0
      %472 = vmatmul.mubr.f32.gmra.mxu0 %v388
      %v473 = vpop.f32.mrf.mxu0
      %v474 = vadd.f32 0.0, %v473
      %v475 = vpop.f32.mrf.mxu0
      %476 = vmatprep.mubr.f32.mxu0 0.0
      %477 = vmatmul.mubr.f32.gmra.mxu0 %v391
      %v478 = vpop.f32.mrf.mxu0
      %v479 = vadd.f32 0.0, %v478
      %v480 = vpop.f32.mrf.mxu0
      %481 = vmatprep.mubr.f32.mxu0 0.0
      %482 = vmatmul.mubr.f32.gmra.mxu0 %v394
      %v483 = vpop.f32.mrf.mxu0
      %v484 = vadd.f32 0.0, %v483
      %v485 = vpop.f32.mrf.mxu0
      %486 = vmatprep.mubr.f32.mxu0 0.0
      %487 = vmatmul.mubr.f32.gmra.mxu0 %v397
      %v488 = vpop.f32.mrf.mxu0
      %v489 = vadd.f32 0.0, %v488
      %v490 = vpop.f32.mrf.mxu0
      %491 = vmatprep.mubr.f32.mxu0 0.0
      %492 = vmatmul.mubr.f32.gmra.mxu0 %v400
      %v493 = vpop.f32.mrf.mxu0
      %v494 = vadd.f32 0.0, %v493
      %v495 = vpop.f32.mrf.mxu0
      %496 = vdwg.mxu0
      %v497 = vsub.f32 %v469, %v323
      %v498 = vsub.f32 %v474, %v324
      %v499 = vsub.f32 %v479, %v325
      %v500 = vsub.f32 %v469, %v332
      %v501 = vsub.f32 %v474, %v333
      %v502 = vsub.f32 %v479, %v334
      %v503 = vsub.f32 %v484, %v323
      %v504 = vsub.f32 %v489, %v324
      %v505 = vsub.f32 %v494, %v325
      %v506 = vsub.f32 %v484, %v332
      %v507 = vsub.f32 %v489, %v333
      %v508 = vsub.f32 %v494, %v334
      %v509 = vmul.f32 %v497, %v497
      %v510 = vmul.f32 %v498, %v498
      %v511 = vmul.f32 %v499, %v499
      %v512 = vmul.f32 %v500, %v500
      %v513 = vmul.f32 %v501, %v501
      %v514 = vmul.f32 %v502, %v502
      %518 = vrot.lane.b32.xlu0 %v512, 127
      %v519 = vpop.permute.xlu0 %518
      %520 = vrot.lane.b32.xlu0 %v513, 127
      %v521 = vpop.permute.xlu0 %520
      %522 = vrot.lane.b32.xlu0 %v514, 127
      %v523 = vpop.permute.xlu0 %522
      %v527 = vadd.f32 %v509, %v519
      %v528 = vadd.f32 %v510, %v521
      %v529 = vadd.f32 %v511, %v523
      %v530 = vrsqrt.pop %v527
      %v531 = vmul.f32 %v527, %v530
      %vm532 = vcmp.eq.f32.partialorder %v527, inf
      %v533 = vsel %vm532, %v527, %v531
      %vm534 = vcmp.eq.f32.partialorder %v527, 0.0
      %v535 = vand.u32 %v527, 2147483648
      %v536 = vsel %vm534, %v535, %v533
      %v537 = vrsqrt.pop %v528
      %v538 = vmul.f32 %v528, %v537
      %vm539 = vcmp.eq.f32.partialorder %v528, inf
      %v540 = vsel %vm539, %v528, %v538
      %vm541 = vcmp.eq.f32.partialorder %v528, 0.0
      %v542 = vand.u32 %v528, 2147483648
      %v543 = vsel %vm541, %v542, %v540
      %v544 = vrsqrt.pop %v529
      %v545 = vmul.f32 %v529, %v544
      %vm546 = vcmp.eq.f32.partialorder %v529, inf
      %v547 = vsel %vm546, %v529, %v545
      %vm548 = vcmp.eq.f32.partialorder %v529, 0.0
      %v549 = vand.u32 %v529, 2147483648
      %v550 = vsel %vm548, %v549, %v547
      %v551 = vmul.f32 %v536, 0.5
      %v552 = vmul.f32 %v543, 0.5
      %v553 = vmul.f32 %v550, 0.5
      %v554 = vmul.f32 %v503, %v503
      %v555 = vmul.f32 %v504, %v504
      %v556 = vmul.f32 %v505, %v505
      %v557 = vmul.f32 %v506, %v506
      %v558 = vmul.f32 %v507, %v507
      %v559 = vmul.f32 %v508, %v508
      %563 = vrot.lane.b32.xlu0 %v557, 127
      %v564 = vpop.permute.xlu0 %563
      %565 = vrot.lane.b32.xlu0 %v558, 127
      %v566 = vpop.permute.xlu0 %565
      %567 = vrot.lane.b32.xlu0 %v559, 127
      %v568 = vpop.permute.xlu0 %567
      %v572 = vadd.f32 %v554, %v564
      %v573 = vadd.f32 %v555, %v566
      %v574 = vadd.f32 %v556, %v568
      %v575 = vrsqrt.pop %v572
      %v576 = vmul.f32 %v572, %v575
      %vm577 = vcmp.eq.f32.partialorder %v572, inf
      %v578 = vsel %vm577, %v572, %v576
      %vm579 = vcmp.eq.f32.partialorder %v572, 0.0
      %v580 = vand.u32 %v572, 2147483648
      %v581 = vsel %vm579, %v580, %v578
      %v582 = vrsqrt.pop %v573
      %v583 = vmul.f32 %v573, %v582
      %vm584 = vcmp.eq.f32.partialorder %v573, inf
      %v585 = vsel %vm584, %v573, %v583
      %vm586 = vcmp.eq.f32.partialorder %v573, 0.0
      %v587 = vand.u32 %v573, 2147483648
      %v588 = vsel %vm586, %v587, %v585
      %v589 = vrsqrt.pop %v574
      %v590 = vmul.f32 %v574, %v589
      %vm591 = vcmp.eq.f32.partialorder %v574, inf
      %v592 = vsel %vm591, %v574, %v590
      %vm593 = vcmp.eq.f32.partialorder %v574, 0.0
      %v594 = vand.u32 %v574, 2147483648
      %v595 = vsel %vm593, %v594, %v592
      %v596 = vmul.f32 %v581, 0.5
      %v597 = vmul.f32 %v588, 0.5
      %v598 = vmul.f32 %v595, 0.5
      %v599 = vmax.f32 %v551, %v596
      %v600 = vmax.f32 %v552, %v597
      %v601 = vmax.f32 %v553, %v598
      %v602 = vmul.f32 %v599, 2.0
      %v603 = vmul.f32 %v600, 2.0
      %v604 = vmul.f32 %v601, 2.0
      %v605 = vlaneseq
      %v606 = vshrl.u32 %v605, 7
      %v607 = vadd.s32 %v606, 8
      %v608 = vadd.s32 %v606, 16
      %vm609 = vcmp.eq.s32.totalorder %v606, 0
      %vm610 = vcmp.eq.s32.totalorder %v607, 0
      %vm611 = vcmp.eq.s32.totalorder %v608, 0
      %v612 = vsel %vm609, %v370, %v602
      %v613 = vsel %vm610, %v370, %v603
      %v614 = vsel %vm611, %v370, %v604
      %v615 = vld [vmem:[%s3] sm:$0xff]
      %v616 = vld [vmem:[%s3 + $0x8] sm:$0xff]
      %v617 = vld [vmem:[%s3 + $0x10] sm:$0xff]
      %v618 = vmax.f32 %v615, 0.0
      %v619 = vmax.f32 %v616, 0.0
      %v620 = vmax.f32 %v617, 0.0
      %v621 = vmul.f32 %v612, %v618
      %v622 = vmul.f32 %v613, %v619
      %v623 = vmul.f32 %v614, %v620
      %627 = vrot.lane.b32.xlu0 %v618, 127
      %v628 = vpop.permute.xlu0 %627
      %629 = vrot.lane.b32.xlu0 %v619, 127
      %v630 = vpop.permute.xlu0 %629
      %631 = vrot.lane.b32.xlu0 %v620, 127
      %v632 = vpop.permute.xlu0 %631
      %v636 = vadd.f32 %v621, %v628
      %v637 = vadd.f32 %v622, %v630
      %v638 = vadd.f32 %v623, %v632
      %vm639 = vcmp.eq.s32.totalorder %v372, 1
      %641 = vset.pattern.permute.xlu0 0
      %642 = vperm.xlu0 %641, %v636
      %v643 = vpop.permute.xlu0 %642
      %646 = vset.pattern.permute.xlu0 0
      %647 = vperm.xlu0 %646, %v637
      %v648 = vpop.permute.xlu0 %647
      %651 = vset.pattern.permute.xlu0 0
      %652 = vperm.xlu0 %651, %v638
      %v653 = vpop.permute.xlu0 %652
      %v655 = vsel %vm639, %v332, %v643
      %v656 = vsel %vm639, %v333, %v648
      %v657 = vsel %vm639, %v334, %v653
      %v658 = vsel %vm373, %v323, %v655
      %v659 = vsel %vm373, %v324, %v656
      %v660 = vsel %vm373, %v325, %v657
      %vm661 = vcmask 23552
      %662 = vst.msk [vmem:[%s197] sm:$0xff] %vm661, %v658
      %663 = vst.msk [vmem:[%s197 + $0x8] sm:$0xff] %vm661, %v659
      %664 = vst.msk [vmem:[%s197 + $0x10] sm:$0xff] %vm661, %v660
      %p665 = scmp.lt.s32.totalorder %s15, 1
      %s666 = scalar_select %p665, %s15, 1
      %s667 = smul.addr %s666, 3
      %s668 = smul.addr %s667, 8
      %s669 = scalar_lea.vmem %s4, %s668
      // Predicated region
      $region37: #{iuv_estimator_forward.3} parent=35 // pred_check
        %p670 = pneg %p122
      $region38: #{iuv_estimator_forward.3} parent=35 // pred_check_branch
        %672 = sbr.rel (%p670) target = $region40
      $region39: #{iuv_estimator_forward.3} parent=35 // pred_region
        _
      $region40: #{iuv_estimator_forward.3} parent=35 // pred_fallthru
        _
    $region36: #{iuv_estimator_forward.3} parent=5 // pred_fallthru
      _
    %p673 = scmp.le.s32.totalorder 2, %s10
    // Predicated region
    $region41: #{iuv_estimator_forward.3} parent=5 // pred_check
      %p674 = pneg %p673
    $region42: #{iuv_estimator_forward.3} parent=5 // pred_check_branch
      %676 = sbr.rel (%p674) target = $region44
    $region43: #{iuv_estimator_forward.3} parent=5 // pred_region
      %s677 = ssub.s32 %s10, 2
      // Predicated region
      $region45: #{iuv_estimator_forward.3} parent=43 // pred_check
        %p678 = pneg %p128
      $region46: #{iuv_estimator_forward.3} parent=43 // pred_check_branch
        %680 = sbr.rel (%p678) target = $region48
      $region47: #{iuv_estimator_forward.3} parent=43 // pred_region
        %p681 = scmp.lt.s32.totalorder %s16, 1
        %s682 = scalar_select %p681, %s16, 1
        %s683 = smul.addr %s682, 3
        %s684 = smul.addr %s683, 8
        %s685 = scalar_lea.vmem %s4, %s684
      $region48: #{iuv_estimator_forward.3} parent=43 // pred_fallthru
        _
    $region44: #{iuv_estimator_forward.3} parent=5 // pred_fallthru
      _
  $region6: #{iuv_estimator_forward.3} parent=0 // loop_footer
    %s14 = sadd.s32 1, %s10
  $region7: #{iuv_estimator_forward.3} parent=0 // loop_footer_branch
    %9 = sbr.rel target = $region3
  $region8: #{iuv_estimator_forward.3} parent=0 // loop_exit
    _

</llo_original>
